<compile_context>
chip_gen: v6e
topology: v6e:2x2x1
jax: 0.10.0
libtpu: 0.0.40
codegen_flags: <defaults>
</compile_context>

<pallas_src>
import jax
import jax.numpy as jnp
from jax.experimental import pallas as pl
from jax.experimental.pallas import tpu as pltpu

# ----------------------------- model dimensions ------------------------------
B = 2          # batch
S = 8          # sentence_len
R = 4          # rele_sen_num
L = 6          # rele_sen_len
VOCAB = 30
D = 32         # stands in for 768 (bert-base hidden)
HG = 16        # stands in for 300 (gcn hidden)
HU = D + 2 * HG          # unified feature dim  (768+300+300 analogue) = 64
PAIR = 2 * HU            # pair feature dim = 128
HH = PAIR // 2           # classifier hidden = 64
HEAD_W = 3 + 3 + 3 + 4   # aspect | opinion | pair | triple logits = 13
HEAD_PAD = 128           # lane-dense padded head width


# ------------------------------- Pallas kernel --------------------------------

def _bert_gcn0_fused_kernel(text_ref, rel_ref,
                            wg0_ref, bg0_ref, wg1_ref, bg1_ref,
                            w1_ref, b1_ref, wh_ref, bh_ref,
                            out_ref):
    """Entire BERT_GCN0 forward (post-encoder) in one VMEM-resident kernel."""
    text = text_ref[...]                        # (B, S, D)  float32
    rel = rel_ref[...]                          # (B, R, D)
    b, s, d = text.shape

    # --- attention + softmax: F.softmax(q @ k^T, -1) ---------------------------
    def attn_softmax(q, k):
        logits = jnp.einsum('bsd,btd->bst', q, k,
                            preferred_element_type=jnp.float32)
        m = jnp.max(logits, axis=-1, keepdims=True)
        e = jnp.exp(logits - m)
        return e * pl.reciprocal(jnp.sum(e, axis=-1, keepdims=True), approx=True)

    # --- generate_formal_adj + preprocess_adj + (A_norm @ X)[:, :S, :] ---------
    # For A_formal = [[0, Aw], [Aw^T, 0]] and A_hat = A_formal + I:
    #   deg(row i<S)   = 1 + rowsum(Aw)[i]
    #   deg(row S+j)   = 1 + colsum(Aw)[j]
    #   (D^-1/2 A_hat D^-1/2 @ [X_top; X_bot])[i]
    #       = dinv_top[i]^2 * X_top[i]
    #       + dinv_top[i]   * sum_j Aw[i,j] * dinv_bot[j] * X_bot[j]
    # Only the first S rows (the ones kept by [:, :sentence_len, :]) are needed,
    # so the (2S,2S)/(S+R,S+R) matrices are never materialized.
    def norm_adj_message(attn, x_top, x_bot):
        d_top = 1.0 + jnp.sum(attn, axis=-1, keepdims=True)           # (B,S,1)
        d_bot = 1.0 + jnp.sum(attn, axis=1, keepdims=True)            # (B,1,T)
        dinv_top = jnp.where(d_top > 0.0, jax.lax.rsqrt(d_top), 0.0)  # inf/nan->0
        dinv_bot = jnp.where(d_bot > 0.0, jax.lax.rsqrt(d_bot), 0.0)
        msg = jnp.einsum('bst,btd->bsd', attn * dinv_bot, x_bot,
                         preferred_element_type=jnp.float32)
        return dinv_top * dinv_top * x_top + dinv_top * msg           # (B,S,D)

    attn_local = attn_softmax(text, text)          # (B,S,S)
    attn_global = attn_softmax(text, rel)          # (B,S,R)
    loc_agg = norm_adj_message(attn_local, text, text)    # (B,S,D)
    glob_agg = norm_adj_message(attn_global, text, rel)   # (B,S,D)

    # --- GCNforFeature_1 linears (batch folded into M) -------------------------
    text_f = text.reshape(b * s, d)
    local_out = jnp.dot(loc_agg.reshape(b * s, d), wg0_ref[...],
                        preferred_element_type=jnp.float32) + bg0_ref[...]
    global_out = jnp.dot(glob_agg.reshape(b * s, d), wg1_ref[...],
                         preferred_element_type=jnp.float32) + bg1_ref[...]

    # --- unified features + fused PairGeneration0 / SequenceLabel heads --------
    unified = jnp.concatenate([text_f, local_out, global_out], axis=-1)  # (B*S,HU)
    hu = unified.shape[-1]
    w1 = w1_ref[...]                                # (2*HU, 2*HH) = [W1_ao | W1_tri]
    # pair[b,i,j] = concat(u[b,j], u[b,i]);  pair @ W1 = u[j]@W1[:HU] + u[i]@W1[HU:]
    a_j = jnp.dot(unified, w1[:hu, :], preferred_element_type=jnp.float32) + b1_ref[...]
    a_i = jnp.dot(unified, w1[hu:, :], preferred_element_type=jnp.float32)

    blocks = []
    for bi in range(b):                             # B is tiny & static -> unrolled
        aj = a_j[bi * s:(bi + 1) * s, :]            # (S, 2*HH)
        ai = a_i[bi * s:(bi + 1) * s, :]
        hid = jnp.maximum(aj[None, :, :] + ai[:, None, :], 0.0)   # (S,S,2*HH) relu
        blocks.append(hid.reshape(s * s, -1))
    hidden = jnp.concatenate(blocks, axis=0)        # (B*S*S, 2*HH) = (128, 128)

    # single lane-dense head matmul: [Ws_ao|Wo_ao|Ws_tri|Wo_tri|0-pad] -> 128 lanes
    out_ref[...] = (jnp.dot(hidden, wh_ref[...],
                            preferred_element_type=jnp.float32) + bh_ref[...])


# ------------------------------ JAX glue / params ------------------------------

def linear_params(key, in_dim, out_dim):
    # mimics nn.Linear default (uniform +-1/sqrt(fan_in)); stored as (in, out).
    kw, kb = jax.random.split(key)
    bound = 1.0 / (in_dim ** 0.5)
    W = jax.random.uniform(kw, (in_dim, out_dim), jnp.float32, -bound, bound)
    b = jax.random.uniform(kb, (1, out_dim), jnp.float32, -bound, bound)
    return W, b


def pack_classifier_heads(ao, triple):
    """Fuse both SequenceLabel classifiers into one first-linear and one
    block-diagonal, zero-padded, lane-dense head weight."""
    W1_ao, b1_ao, Ws_ao, bs_ao, Wo_ao, bo_ao = ao
    W1_t, b1_t, Ws_t, bs_t, Wo_t, bo_t = triple
    hh = W1_ao.shape[1]
    W1_all = jnp.concatenate([W1_ao, W1_t], axis=1)          # (PAIR, 2*HH)
    b1_all = jnp.concatenate([b1_ao, b1_t], axis=1)          # (1, 2*HH)
    W_head = jnp.zeros((2 * hh, HEAD_PAD), jnp.float32)
    W_head = W_head.at[:hh, 0:3].set(Ws_ao)
    W_head = W_head.at[:hh, 3:6].set(Wo_ao)
    W_head = W_head.at[hh:, 6:9].set(Ws_t)
    W_head = W_head.at[hh:, 9:13].set(Wo_t)
    b_head = jnp.zeros((1, HEAD_PAD), jnp.float32)
    b_head = b_head.at[:, 0:3].set(bs_ao)
    b_head = b_head.at[:, 3:6].set(bo_ao)
    b_head = b_head.at[:, 6:9].set(bs_t)
    b_head = b_head.at[:, 9:13].set(bo_t)
    return W1_all, b1_all, W_head, b_head


def init_params(key):
    ks = jax.random.split(key, 10)
    # aspect_opinion_classifier (SequenceLabelForAO): linear(2H->H), sub(H->3), obj(H->3)
    ao = (*linear_params(ks[4], PAIR, HH),
          *linear_params(ks[5], HH, 3),
          *linear_params(ks[6], HH, 3))
    # triple_classifier (SequenceLabelForTriple): linear(2H->H), sub(H->3), obj(H->4)
    triple = (*linear_params(ks[7], PAIR, HH),
              *linear_params(ks[8], HH, 3),
              *linear_params(ks[9], HH, 4))
    return {
        "emb": jax.random.normal(ks[0], (VOCAB, D), jnp.float32) * 0.1,
        "emb_rel": jax.random.normal(ks[1], (VOCAB, D), jnp.float32) * 0.1,
        "gcn0": linear_params(ks[2], D, HG),
        "gcn1": linear_params(ks[3], D, HG),
        "cls_fused": pack_classifier_heads(ao, triple),
    }


def bert_gcn0_forward(params, text_indices, mask, relevant_sentences, rel_pres):
    del mask, relevant_sentences  # mask only feeds BERT; rel. sentences only shape

    # TODO(synk): the two BERT encoders have no clean single-kernel Pallas
    # equivalent; replaced by deterministic embedding lookup (local tokens) and
    # embedding + mean pooling (stand-in for the [CLS] vector of each relevant
    # sentence).  text_embed_dropout / gcn / classifier dropouts: identity (eval).
    text_out = params["emb"][text_indices]                    # (B, S, D)
    rel_out = jnp.mean(params["emb_rel"][rel_pres], axis=2)   # (B, R, D)

    wg0, bg0 = params["gcn0"]
    wg1, bg1 = params["gcn1"]
    w1_all, b1_all, w_head, b_head = params["cls_fused"]

    out = pl.pallas_call(
        _bert_gcn0_fused_kernel,
        out_shape=jax.ShapeDtypeStruct((B * S * S, HEAD_PAD), jnp.float32),
        in_specs=[pl.BlockSpec(memory_space=pltpu.MemorySpace.VMEM)] * 10,
        out_specs=pl.BlockSpec(memory_space=pltpu.MemorySpace.VMEM),
    )(text_out, rel_out, wg0, bg0, wg1, bg1, w1_all, b1_all, w_head, b_head)

    # NOTE: original source uses `pair_text` before assigning it (a bug); here
    # both classifiers consume the same fused pair features.
    aspect_probs = out[:, 0:3]        # (B*S*S, 3)
    opinion_probs = out[:, 3:6]       # (B*S*S, 3)
    pair_probs = out[:, 6:9]          # (B*S*S, 3)
    triple_probs = out[:, 9:13]       # (B*S*S, 4)
    return aspect_probs, opinion_probs, pair_probs, triple_probs


# ------------------------------------ main ------------------------------------

if __name__ == "__main__":
    key = jax.random.PRNGKey(0)
    kp, k1, k2, k3 = jax.random.split(key, 4)
    params = init_params(kp)

    text_indices = jax.random.randint(k1, (B, S), 0, VOCAB)
    mask = jnp.ones((B, S), jnp.int32)
    relevant_sentences = jax.random.randint(k2, (B, R), 0, 100)
    relevant_sentences_presentation = jax.random.randint(k3, (B, R, L), 0, VOCAB)

    fwd = jax.jit(bert_gcn0_forward)
    outs = fwd(params, text_indices, mask,
               relevant_sentences, relevant_sentences_presentation)
    outs = jax.block_until_ready(outs)

    assert outs[0].shape == (B * S * S, 3)
    assert outs[1].shape == (B * S * S, 3)
    assert outs[2].shape == (B * S * S, 3)
    assert outs[3].shape == (B * S * S, 4)
    assert all(bool(jnp.all(jnp.isfinite(o))) for o in outs)
    print("KERNEL_OK")
</pallas_src>

<mosaic_0001>
module attributes {stable_mosaic.version = 11 : i64} {
  func.func @_bert_gcn0_fused_kernel(%arg0: memref<2x8x32xf32, #tpu.memory_space<vmem>>, %arg1: memref<2x4x32xf32, #tpu.memory_space<vmem>>, %arg2: memref<32x16xf32, #tpu.memory_space<vmem>>, %arg3: memref<1x16xf32, #tpu.memory_space<vmem>>, %arg4: memref<32x16xf32, #tpu.memory_space<vmem>>, %arg5: memref<1x16xf32, #tpu.memory_space<vmem>>, %arg6: memref<128x128xf32, #tpu.memory_space<vmem>>, %arg7: memref<1x128xf32, #tpu.memory_space<vmem>>, %arg8: memref<128x128xf32, #tpu.memory_space<vmem>>, %arg9: memref<1x128xf32, #tpu.memory_space<vmem>>, %arg10: memref<128x128xf32, #tpu.memory_space<vmem>>) attributes {dimension_semantics = [], scalar_prefetch = 0 : i64, scratch_operands = 0 : i64, tpu.core_type = #tpu.core_type<tc>} {
    %c0 = arith.constant 0 : index
    %c0_0 = arith.constant 0 : index
    %c0_1 = arith.constant 0 : index
    %0 = vector.load %arg0[%c0, %c0_0, %c0_1] : memref<2x8x32xf32, #tpu.memory_space<vmem>>, vector<2x8x32xf32>
    %c0_2 = arith.constant 0 : index
    %c0_3 = arith.constant 0 : index
    %c0_4 = arith.constant 0 : index
    %1 = vector.load %arg1[%c0_2, %c0_3, %c0_4] : memref<2x4x32xf32, #tpu.memory_space<vmem>>, vector<2x4x32xf32>
    "tpu.trace_start"() <{level = 10 : i32, message = "bsd,btd->bst"}> : () -> ()
    %cst = arith.constant dense<0.000000e+00> : vector<2x8x8xf32>
    %2 = tpu.matmul %0, %0, %cst {dimension_numbers = #tpu.dot_dimension_numbers<[2], [2], [1], [1], [0, 0, 0, 1, 1, 1], [0], [0]>} : vector<2x8x32xf32>, vector<2x8x32xf32>, vector<2x8x8xf32> -> vector<2x8x8xf32>
    "tpu.trace_stop"() : () -> ()
    %cst_5 = arith.constant dense<0xFF800000> : vector<2x8xf32>
    %3 = vector.multi_reduction <maximumf>, %2, %cst_5 [2] : vector<2x8x8xf32> to vector<2x8xf32>
    %4 = vector.shape_cast %3 : vector<2x8xf32> to vector<2x8x1xf32>
    %5 = vector.broadcast %4 : vector<2x8x1xf32> to vector<2x8x8xf32>
    %6 = arith.subf %2, %5 : vector<2x8x8xf32>
    %7 = math.exp %6 : vector<2x8x8xf32>
    %cst_6 = arith.constant dense<0.000000e+00> : vector<2x8xf32>
    %8 = vector.multi_reduction <add>, %7, %cst_6 [2] : vector<2x8x8xf32> to vector<2x8xf32>
    %9 = vector.shape_cast %8 : vector<2x8xf32> to vector<2x8x1xf32>
    %10 = tpu.reciprocal %9 {approx = true} : vector<2x8x1xf32> -> vector<2x8x1xf32>
    %11 = vector.broadcast %10 : vector<2x8x1xf32> to vector<2x8x8xf32>
    %12 = arith.mulf %7, %11 : vector<2x8x8xf32>
    "tpu.trace_start"() <{level = 10 : i32, message = "bsd,btd->bst"}> : () -> ()
    %cst_7 = arith.constant dense<0.000000e+00> : vector<2x8x4xf32>
    %13 = tpu.matmul %0, %1, %cst_7 {dimension_numbers = #tpu.dot_dimension_numbers<[2], [2], [1], [1], [0, 0, 0, 1, 1, 1], [0], [0]>} : vector<2x8x32xf32>, vector<2x4x32xf32>, vector<2x8x4xf32> -> vector<2x8x4xf32>
    "tpu.trace_stop"() : () -> ()
    %cst_8 = arith.constant dense<0xFF800000> : vector<2x8xf32>
    %14 = vector.multi_reduction <maximumf>, %13, %cst_8 [2] : vector<2x8x4xf32> to vector<2x8xf32>
    %15 = vector.shape_cast %14 : vector<2x8xf32> to vector<2x8x1xf32>
    %16 = vector.broadcast %15 : vector<2x8x1xf32> to vector<2x8x4xf32>
    %17 = arith.subf %13, %16 : vector<2x8x4xf32>
    %18 = math.exp %17 : vector<2x8x4xf32>
    %cst_9 = arith.constant dense<0.000000e+00> : vector<2x8xf32>
    %19 = vector.multi_reduction <add>, %18, %cst_9 [2] : vector<2x8x4xf32> to vector<2x8xf32>
    %20 = vector.shape_cast %19 : vector<2x8xf32> to vector<2x8x1xf32>
    %21 = tpu.reciprocal %20 {approx = true} : vector<2x8x1xf32> -> vector<2x8x1xf32>
    %22 = vector.broadcast %21 : vector<2x8x1xf32> to vector<2x8x4xf32>
    %23 = arith.mulf %18, %22 : vector<2x8x4xf32>
    %cst_10 = arith.constant dense<0.000000e+00> : vector<2x8xf32>
    %24 = vector.multi_reduction <add>, %12, %cst_10 [2] : vector<2x8x8xf32> to vector<2x8xf32>
    %25 = vector.shape_cast %24 : vector<2x8xf32> to vector<2x8x1xf32>
    %cst_11 = arith.constant 1.000000e+00 : f32
    %26 = vector.broadcast %cst_11 : f32 to vector<2x8x1xf32>
    %27 = arith.addf %26, %25 : vector<2x8x1xf32>
    %cst_12 = arith.constant dense<0.000000e+00> : vector<2x8xf32>
    %28 = vector.multi_reduction <add>, %12, %cst_12 [1] : vector<2x8x8xf32> to vector<2x8xf32>
    %29 = vector.shape_cast %28 : vector<2x8xf32> to vector<2x1x8xf32>
    %cst_13 = arith.constant 1.000000e+00 : f32
    %30 = vector.broadcast %cst_13 : f32 to vector<2x1x8xf32>
    %31 = arith.addf %30, %29 : vector<2x1x8xf32>
    %cst_14 = arith.constant 0.000000e+00 : f32
    %32 = vector.broadcast %cst_14 : f32 to vector<2x8x1xf32>
    %33 = arith.cmpf ogt, %27, %32 : vector<2x8x1xf32>
    %34 = math.rsqrt %27 : vector<2x8x1xf32>
    %cst_15 = arith.constant 0.000000e+00 : f32
    %35 = vector.broadcast %cst_15 : f32 to vector<2x8x1xf32>
    %36 = arith.select %33, %34, %35 : vector<2x8x1xi1>, vector<2x8x1xf32>
    %cst_16 = arith.constant 0.000000e+00 : f32
    %37 = vector.broadcast %cst_16 : f32 to vector<2x1x8xf32>
    %38 = arith.cmpf ogt, %31, %37 : vector<2x1x8xf32>
    %39 = math.rsqrt %31 : vector<2x1x8xf32>
    %cst_17 = arith.constant 0.000000e+00 : f32
    %40 = vector.broadcast %cst_17 : f32 to vector<2x1x8xf32>
    %41 = arith.select %38, %39, %40 : vector<2x1x8xi1>, vector<2x1x8xf32>
    %42 = vector.broadcast %41 : vector<2x1x8xf32> to vector<2x8x8xf32>
    %43 = arith.mulf %12, %42 : vector<2x8x8xf32>
    "tpu.trace_start"() <{level = 10 : i32, message = "bst,btd->bsd"}> : () -> ()
    %cst_18 = arith.constant dense<0.000000e+00> : vector<2x8x32xf32>
    %44 = tpu.matmul %43, %0, %cst_18 {dimension_numbers = #tpu.dot_dimension_numbers<[2], [1], [1], [2], [0, 0, 0, 1, 1, 2], [0], [0]>} : vector<2x8x8xf32>, vector<2x8x32xf32>, vector<2x8x32xf32> -> vector<2x8x32xf32>
    "tpu.trace_stop"() : () -> ()
    %45 = arith.mulf %36, %36 : vector<2x8x1xf32>
    %46 = vector.broadcast %45 : vector<2x8x1xf32> to vector<2x8x32xf32>
    %47 = arith.mulf %46, %0 : vector<2x8x32xf32>
    %48 = vector.broadcast %36 : vector<2x8x1xf32> to vector<2x8x32xf32>
    %49 = arith.mulf %48, %44 : vector<2x8x32xf32>
    %50 = arith.addf %47, %49 : vector<2x8x32xf32>
    %cst_19 = arith.constant dense<0.000000e+00> : vector<2x8xf32>
    %51 = vector.multi_reduction <add>, %23, %cst_19 [2] : vector<2x8x4xf32> to vector<2x8xf32>
    %52 = vector.shape_cast %51 : vector<2x8xf32> to vector<2x8x1xf32>
    %cst_20 = arith.constant 1.000000e+00 : f32
    %53 = vector.broadcast %cst_20 : f32 to vector<2x8x1xf32>
    %54 = arith.addf %53, %52 : vector<2x8x1xf32>
    %cst_21 = arith.constant dense<0.000000e+00> : vector<2x4xf32>
    %55 = vector.multi_reduction <add>, %23, %cst_21 [1] : vector<2x8x4xf32> to vector<2x4xf32>
    %56 = vector.shape_cast %55 : vector<2x4xf32> to vector<2x1x4xf32>
    %cst_22 = arith.constant 1.000000e+00 : f32
    %57 = vector.broadcast %cst_22 : f32 to vector<2x1x4xf32>
    %58 = arith.addf %57, %56 : vector<2x1x4xf32>
    %cst_23 = arith.constant 0.000000e+00 : f32
    %59 = vector.broadcast %cst_23 : f32 to vector<2x8x1xf32>
    %60 = arith.cmpf ogt, %54, %59 : vector<2x8x1xf32>
    %61 = math.rsqrt %54 : vector<2x8x1xf32>
    %cst_24 = arith.constant 0.000000e+00 : f32
    %62 = vector.broadcast %cst_24 : f32 to vector<2x8x1xf32>
    %63 = arith.select %60, %61, %62 : vector<2x8x1xi1>, vector<2x8x1xf32>
    %cst_25 = arith.constant 0.000000e+00 : f32
    %64 = vector.broadcast %cst_25 : f32 to vector<2x1x4xf32>
    %65 = arith.cmpf ogt, %58, %64 : vector<2x1x4xf32>
    %66 = math.rsqrt %58 : vector<2x1x4xf32>
    %cst_26 = arith.constant 0.000000e+00 : f32
    %67 = vector.broadcast %cst_26 : f32 to vector<2x1x4xf32>
    %68 = arith.select %65, %66, %67 : vector<2x1x4xi1>, vector<2x1x4xf32>
    %69 = vector.broadcast %68 : vector<2x1x4xf32> to vector<2x8x4xf32>
    %70 = arith.mulf %23, %69 : vector<2x8x4xf32>
    "tpu.trace_start"() <{level = 10 : i32, message = "bst,btd->bsd"}> : () -> ()
    %cst_27 = arith.constant dense<0.000000e+00> : vector<2x8x32xf32>
    %71 = tpu.matmul %70, %1, %cst_27 {dimension_numbers = #tpu.dot_dimension_numbers<[2], [1], [1], [2], [0, 0, 0, 1, 1, 2], [0], [0]>} : vector<2x8x4xf32>, vector<2x4x32xf32>, vector<2x8x32xf32> -> vector<2x8x32xf32>
    "tpu.trace_stop"() : () -> ()
    %72 = arith.mulf %63, %63 : vector<2x8x1xf32>
    %73 = vector.broadcast %72 : vector<2x8x1xf32> to vector<2x8x32xf32>
    %74 = arith.mulf %73, %0 : vector<2x8x32xf32>
    %75 = vector.broadcast %63 : vector<2x8x1xf32> to vector<2x8x32xf32>
    %76 = arith.mulf %75, %71 : vector<2x8x32xf32>
    %77 = arith.addf %74, %76 : vector<2x8x32xf32>
    %78 = vector.shape_cast %0 : vector<2x8x32xf32> to vector<16x32xf32>
    %79 = vector.shape_cast %50 : vector<2x8x32xf32> to vector<16x32xf32>
    %c0_28 = arith.constant 0 : index
    %c0_29 = arith.constant 0 : index
    %80 = vector.load %arg2[%c0_28, %c0_29] : memref<32x16xf32, #tpu.memory_space<vmem>>, vector<32x16xf32>
    %cst_30 = arith.constant dense<0.000000e+00> : vector<16x16xf32>
    %81 = tpu.matmul %79, %80, %cst_30 {dimension_numbers = #tpu.dot_dimension_numbers<[1], [0], [0], [1], [0, 0, 1, 1], [], []>} : vector<16x32xf32>, vector<32x16xf32>, vector<16x16xf32> -> vector<16x16xf32>
    %c0_31 = arith.constant 0 : index
    %c0_32 = arith.constant 0 : index
    %82 = vector.load %arg3[%c0_31, %c0_32] : memref<1x16xf32, #tpu.memory_space<vmem>>, vector<1x16xf32>
    %83 = vector.broadcast %82 : vector<1x16xf32> to vector<16x16xf32>
    %84 = arith.addf %81, %83 : vector<16x16xf32>
    %85 = vector.shape_cast %77 : vector<2x8x32xf32> to vector<16x32xf32>
    %c0_33 = arith.constant 0 : index
    %c0_34 = arith.constant 0 : index
    %86 = vector.load %arg4[%c0_33, %c0_34] : memref<32x16xf32, #tpu.memory_space<vmem>>, vector<32x16xf32>
    %cst_35 = arith.constant dense<0.000000e+00> : vector<16x16xf32>
    %87 = tpu.matmul %85, %86, %cst_35 {dimension_numbers = #tpu.dot_dimension_numbers<[1], [0], [0], [1], [0, 0, 1, 1], [], []>} : vector<16x32xf32>, vector<32x16xf32>, vector<16x16xf32> -> vector<16x16xf32>
    %c0_36 = arith.constant 0 : index
    %c0_37 = arith.constant 0 : index
    %88 = vector.load %arg5[%c0_36, %c0_37] : memref<1x16xf32, #tpu.memory_space<vmem>>, vector<1x16xf32>
    %89 = vector.broadcast %88 : vector<1x16xf32> to vector<16x16xf32>
    %90 = arith.addf %87, %89 : vector<16x16xf32>
    %91 = tpu.concatenate %78, %84, %90 in 1 : vector<16x32xf32>, vector<16x16xf32>, vector<16x16xf32> -> vector<16x64xf32>
    %c0_38 = arith.constant 0 : index
    %c0_39 = arith.constant 0 : index
    %92 = vector.load %arg6[%c0_38, %c0_39] : memref<128x128xf32, #tpu.memory_space<vmem>>, vector<128x128xf32>
    %93 = vector.extract_strided_slice %92 {offsets = [0, 0], sizes = [64, 128], strides = [1, 1]} : vector<128x128xf32> to vector<64x128xf32>
    %cst_40 = arith.constant dense<0.000000e+00> : vector<16x128xf32>
    %94 = tpu.matmul %91, %93, %cst_40 {dimension_numbers = #tpu.dot_dimension_numbers<[1], [0], [0], [1], [0, 0, 1, 1], [], []>} : vector<16x64xf32>, vector<64x128xf32>, vector<16x128xf32> -> vector<16x128xf32>
    %c0_41 = arith.constant 0 : index
    %c0_42 = arith.constant 0 : index
    %95 = vector.load %arg7[%c0_41, %c0_42] : memref<1x128xf32, #tpu.memory_space<vmem>>, vector<1x128xf32>
    %96 = vector.broadcast %95 : vector<1x128xf32> to vector<16x128xf32>
    %97 = arith.addf %94, %96 : vector<16x128xf32>
    %98 = vector.extract_strided_slice %92 {offsets = [64, 0], sizes = [64, 128], strides = [1, 1]} : vector<128x128xf32> to vector<64x128xf32>
    %cst_43 = arith.constant dense<0.000000e+00> : vector<16x128xf32>
    %99 = tpu.matmul %91, %98, %cst_43 {dimension_numbers = #tpu.dot_dimension_numbers<[1], [0], [0], [1], [0, 0, 1, 1], [], []>} : vector<16x64xf32>, vector<64x128xf32>, vector<16x128xf32> -> vector<16x128xf32>
    %100 = vector.extract_strided_slice %97 {offsets = [0, 0], sizes = [8, 128], strides = [1, 1]} : vector<16x128xf32> to vector<8x128xf32>
    %101 = vector.extract_strided_slice %99 {offsets = [0, 0], sizes = [8, 128], strides = [1, 1]} : vector<16x128xf32> to vector<8x128xf32>
    %102 = vector.shape_cast %100 : vector<8x128xf32> to vector<1x8x128xf32>
    %103 = vector.shape_cast %101 : vector<8x128xf32> to vector<8x1x128xf32>
    %104 = vector.broadcast %102 : vector<1x8x128xf32> to vector<8x8x128xf32>
    %105 = vector.broadcast %103 : vector<8x1x128xf32> to vector<8x8x128xf32>
    %106 = arith.addf %104, %105 : vector<8x8x128xf32>
    %cst_44 = arith.constant 0.000000e+00 : f32
    %107 = vector.broadcast %cst_44 : f32 to vector<8x8x128xf32>
    %108 = arith.maximumf %106, %107 : vector<8x8x128xf32>
    %109 = vector.shape_cast %108 : vector<8x8x128xf32> to vector<64x128xf32>
    %110 = vector.extract_strided_slice %97 {offsets = [8, 0], sizes = [8, 128], strides = [1, 1]} : vector<16x128xf32> to vector<8x128xf32>
    %111 = vector.extract_strided_slice %99 {offsets = [8, 0], sizes = [8, 128], strides = [1, 1]} : vector<16x128xf32> to vector<8x128xf32>
    %112 = vector.shape_cast %110 : vector<8x128xf32> to vector<1x8x128xf32>
    %113 = vector.shape_cast %111 : vector<8x128xf32> to vector<8x1x128xf32>
    %114 = vector.broadcast %112 : vector<1x8x128xf32> to vector<8x8x128xf32>
    %115 = vector.broadcast %113 : vector<8x1x128xf32> to vector<8x8x128xf32>
    %116 = arith.addf %114, %115 : vector<8x8x128xf32>
    %cst_45 = arith.constant 0.000000e+00 : f32
    %117 = vector.broadcast %cst_45 : f32 to vector<8x8x128xf32>
    %118 = arith.maximumf %116, %117 : vector<8x8x128xf32>
    %119 = vector.shape_cast %118 : vector<8x8x128xf32> to vector<64x128xf32>
    %120 = tpu.concatenate %109, %119 in 0 : vector<64x128xf32>, vector<64x128xf32> -> vector<128x128xf32>
    %c0_46 = arith.constant 0 : index
    %c0_47 = arith.constant 0 : index
    %121 = vector.load %arg8[%c0_46, %c0_47] : memref<128x128xf32, #tpu.memory_space<vmem>>, vector<128x128xf32>
    %cst_48 = arith.constant dense<0.000000e+00> : vector<128x128xf32>
    %122 = tpu.matmul %120, %121, %cst_48 {dimension_numbers = #tpu.dot_dimension_numbers<[1], [0], [0], [1], [0, 0, 1, 1], [], []>} : vector<128x128xf32>, vector<128x128xf32>, vector<128x128xf32> -> vector<128x128xf32>
    %c0_49 = arith.constant 0 : index
    %c0_50 = arith.constant 0 : index
    %123 = vector.load %arg9[%c0_49, %c0_50] : memref<1x128xf32, #tpu.memory_space<vmem>>, vector<1x128xf32>
    %124 = vector.broadcast %123 : vector<1x128xf32> to vector<128x128xf32>
    %125 = arith.addf %122, %124 : vector<128x128xf32>
    %c0_51 = arith.constant 0 : index
    %c0_52 = arith.constant 0 : index
    %126 = vector.load %arg10[%c0_51, %c0_52] : memref<128x128xf32, #tpu.memory_space<vmem>>, vector<128x128xf32>
    tpu.vector_store %arg10[%c0_51, %c0_52], %125 {strides = array<i32>} : memref<128x128xf32, #tpu.memory_space<vmem>>, vector<128x128xf32>,
    return
  }
}

</mosaic_0001>

<llo_original>
// kernel: bert_gcn0_forward.1
$region0: #{bert_gcn0_forward.1}
  #allocation0 [shape = 'u32[]', space=smem, size = 0x4, offset = 0x4, fixed_abs, tag = 'smem constant byte address 0x4 - core index']
  #allocation1 [shape = 'u32[144,128]{1,0:T(1,128)}', space=vmem, size = 0x12000, scoped, tag = 'internal scratch']
  %s0 = inlined_call_operand.vmem [shape: f32[2,8,32], index: 0, kind: input, shape index: {}]
  %s1 = inlined_call_operand.vmem [shape: f32[2,4,32], index: 1, kind: input, shape index: {}]
  %s2 = inlined_call_operand.vmem [shape: f32[32,16], index: 2, kind: input, shape index: {}]
  %s3 = inlined_call_operand.vmem [shape: f32[1,16], index: 3, kind: input, shape index: {}]
  %s4 = inlined_call_operand.vmem [shape: f32[32,16], index: 4, kind: input, shape index: {}]
  %s5 = inlined_call_operand.vmem [shape: f32[1,16], index: 5, kind: input, shape index: {}]
  %s6 = inlined_call_operand.vmem [shape: f32[128,128], index: 6, kind: input, shape index: {}]
  %s7 = inlined_call_operand.vmem [shape: f32[1,128], index: 7, kind: input, shape index: {}]
  %s8 = inlined_call_operand.vmem [shape: f32[128,128], index: 8, kind: input, shape index: {}]
  %s9 = inlined_call_operand.vmem [shape: f32[1,128], index: 9, kind: input, shape index: {}]
  %s10 = inlined_call_operand.vmem [shape: f32[128,128], index: 10, kind: output, shape index: {}]
  %s11 = sld [smem:[#allocation0]]
  $region50: #{bert_gcn0_forward.1} parent=0
    _
  %s13 = ssub.s32 1, %s11
  %s14 = scalar_select 0, %s13, %s11
  // Predicated region
  $region2: #{bert_gcn0_forward.1} parent=0 // pred_check
    _
  $region3: #{bert_gcn0_forward.1} parent=0 // pred_check_branch
    %16 = sbr.rel (0) target = $region5
  $region4: #{bert_gcn0_forward.1} parent=0 // pred_region
    _
  $region5: #{bert_gcn0_forward.1} parent=0 // pred_fallthru
    _
  // Predicated region
  $region6: #{bert_gcn0_forward.1} parent=0 // pred_check
    _
  $region7: #{bert_gcn0_forward.1} parent=0 // pred_check_branch
    %18 = sbr.rel (0) target = $region9
  $region8: #{bert_gcn0_forward.1} parent=0 // pred_region
    _
  $region9: #{bert_gcn0_forward.1} parent=0 // pred_fallthru
    _
  // Predicated region
  $region10: #{bert_gcn0_forward.1} parent=0 // pred_check
    _
  $region11: #{bert_gcn0_forward.1} parent=0 // pred_check_branch
    %20 = sbr.rel (0) target = $region13
  $region12: #{bert_gcn0_forward.1} parent=0 // pred_region
    _
  $region13: #{bert_gcn0_forward.1} parent=0 // pred_fallthru
    _
  // Predicated region
  $region14: #{bert_gcn0_forward.1} parent=0 // pred_check
    _
  $region15: #{bert_gcn0_forward.1} parent=0 // pred_check_branch
    %22 = sbr.rel (0) target = $region17
  $region16: #{bert_gcn0_forward.1} parent=0 // pred_region
    _
  $region17: #{bert_gcn0_forward.1} parent=0 // pred_fallthru
    _
  // Predicated region
  $region18: #{bert_gcn0_forward.1} parent=0 // pred_check
    _
  $region19: #{bert_gcn0_forward.1} parent=0 // pred_check_branch
    %24 = sbr.rel (0) target = $region21
  $region20: #{bert_gcn0_forward.1} parent=0 // pred_region
    _
  $region21: #{bert_gcn0_forward.1} parent=0 // pred_fallthru
    _
  // Predicated region
  $region22: #{bert_gcn0_forward.1} parent=0 // pred_check
    _
  $region23: #{bert_gcn0_forward.1} parent=0 // pred_check_branch
    %26 = sbr.rel (0) target = $region25
  $region24: #{bert_gcn0_forward.1} parent=0 // pred_region
    _
  $region25: #{bert_gcn0_forward.1} parent=0 // pred_fallthru
    _
  // Predicated region
  $region26: #{bert_gcn0_forward.1} parent=0 // pred_check
    _
  $region27: #{bert_gcn0_forward.1} parent=0 // pred_check_branch
    %28 = sbr.rel (0) target = $region29
  $region28: #{bert_gcn0_forward.1} parent=0 // pred_region
    _
  $region29: #{bert_gcn0_forward.1} parent=0 // pred_fallthru
    _
  // Predicated region
  $region30: #{bert_gcn0_forward.1} parent=0 // pred_check
    _
  $region31: #{bert_gcn0_forward.1} parent=0 // pred_check_branch
    %30 = sbr.rel (0) target = $region33
  $region32: #{bert_gcn0_forward.1} parent=0 // pred_region
    _
  $region33: #{bert_gcn0_forward.1} parent=0 // pred_fallthru
    _
  // Predicated region
  $region34: #{bert_gcn0_forward.1} parent=0 // pred_check
    _
  $region35: #{bert_gcn0_forward.1} parent=0 // pred_check_branch
    %32 = sbr.rel (0) target = $region37
  $region36: #{bert_gcn0_forward.1} parent=0 // pred_region
    _
  $region37: #{bert_gcn0_forward.1} parent=0 // pred_fallthru
    _
  // Predicated region
  $region38: #{bert_gcn0_forward.1} parent=0 // pred_check
    _
  $region39: #{bert_gcn0_forward.1} parent=0 // pred_check_branch
    %34 = sbr.rel (0) target = $region41
  $region40: #{bert_gcn0_forward.1} parent=0 // pred_region
    _
  $region41: #{bert_gcn0_forward.1} parent=0 // pred_fallthru
    _
  %v35 = vld [vmem:[%s0] sm:$0xff]
  %v36 = vld [vmem:[%s0 + $0x8] sm:$0xff]
  %v37 = vld [vmem:[%s1] sm:$0xf]
  %v38 = vld [vmem:[%s1 + $0x4] sm:$0xf]
  %vm39 = vcmask 261120
  %v41 = vsel %vm39, %v35, 0
  %43 = vmatprep.subr.mxu0 0.0
  %44 = vmatpush1.xpose.msra.mxu0 0.0
  %45 = vmatprep.subr.mxu0 0.0
  %46 = vmatpush1.xpose.msra.mxu0 0.0
  %47 = vmatprep.subr.mxu0 0.0
  %48 = vmatpush1.xpose.msra.mxu0 0.0
  %49 = vmatprep.subr.mxu0 0.0
  %50 = vmatpush1.xpose.msra.mxu0 0.0
  %51 = vmatprep.subr.mxu0 0.0
  %52 = vmatpush1.xpose.msra.mxu0 0.0
  %53 = vmatprep.subr.mxu0 0.0
  %54 = vmatpush1.xpose.msra.mxu0 0.0
  %55 = vmatprep.subr.mxu0 0.0
  %56 = vmatpush1.xpose.msra.mxu0 0.0
  %57 = vmatprep.subr.mxu0 0.0
  %58 = vmatpush1.xpose.msra.mxu0 0.0
  %59 = vmatprep.subr.mxu0 0.0
  %60 = vmatpush1.xpose.msra.mxu0 0.0
  %61 = vmatprep.subr.mxu0 0.0
  %62 = vmatpush1.xpose.msra.mxu0 0.0
  %63 = vmatprep.subr.mxu0 0.0
  %64 = vmatpush1.xpose.msra.mxu0 0.0
  %65 = vmatprep.subr.mxu0 0.0
  %66 = vmatpush1.xpose.msra.mxu0 0.0
  %67 = vmatprep.subr.mxu0 0.0
  %68 = vmatpush1.xpose.msra.mxu0 0.0
  %69 = vmatprep.subr.mxu0 0.0
  %70 = vmatpush1.xpose.msra.mxu0 0.0
  %71 = vmatprep.subr.mxu0 0.0
  %72 = vmatpush1.xpose.msra.mxu0 0.0
  %73 = vmatprep.subr.mxu0 0.0
  %74 = vmatpush1.xpose.msra.mxu0 %v41
  %75 = vmatprep.subr.mxu0 0.0
  %76 = vmatpush2.xpose.msra.mxu0 0.0
  %77 = vmatprep.subr.mxu0 0.0
  %78 = vmatpush2.xpose.msra.mxu0 0.0
  %79 = vmatprep.subr.mxu0 0.0
  %80 = vmatpush2.xpose.msra.mxu0 0.0
  %81 = vmatprep.subr.mxu0 0.0
  %82 = vmatpush2.xpose.msra.mxu0 0.0
  %83 = vmatprep.subr.mxu0 0.0
  %84 = vmatpush2.xpose.msra.mxu0 0.0
  %85 = vmatprep.subr.mxu0 0.0
  %86 = vmatpush2.xpose.msra.mxu0 0.0
  %87 = vmatprep.subr.mxu0 0.0
  %88 = vmatpush2.xpose.msra.mxu0 0.0
  %89 = vmatprep.subr.mxu0 0.0
  %90 = vmatpush2.xpose.msra.mxu0 0.0
  %91 = vmatprep.subr.mxu0 0.0
  %92 = vmatpush2.xpose.msra.mxu0 0.0
  %93 = vmatprep.subr.mxu0 0.0
  %94 = vmatpush2.xpose.msra.mxu0 0.0
  %95 = vmatprep.subr.mxu0 0.0
  %96 = vmatpush2.xpose.msra.mxu0 0.0
  %97 = vmatprep.subr.mxu0 0.0
  %98 = vmatpush2.xpose.msra.mxu0 0.0
  %99 = vmatprep.subr.mxu0 0.0
  %100 = vmatpush2.xpose.msra.mxu0 0.0
  %101 = vmatprep.subr.mxu0 0.0
  %102 = vmatpush2.xpose.msra.mxu0 0.0
  %103 = vmatprep.subr.mxu0 0.0
  %104 = vmatpush2.xpose.msra.mxu0 0.0
  %105 = vmatprep.subr.mxu0 0.0
  %106 = vmatpush2.xpose.msra.mxu0 0.0
  %107 = vmatprep.mubr.f32.mxu0 0.0
  %108 = vmatmul.mubr.f32.gmra.mxu0 %v41
  %v109 = vpop.f32.mrf.mxu0
  %v110 = vadd.f32 0.0, %v109
  %v111 = vpop.f32.mrf.mxu0
  %112 = vdwg.mxu0
  %v114 = vsel %vm39, %v36, 0
  %116 = vmatprep.subr.mxu0 0.0
  %117 = vmatpush1.xpose.msra.mxu0 0.0
  %118 = vmatprep.subr.mxu0 0.0
  %119 = vmatpush1.xpose.msra.mxu0 0.0
  %120 = vmatprep.subr.mxu0 0.0
  %121 = vmatpush1.xpose.msra.mxu0 0.0
  %122 = vmatprep.subr.mxu0 0.0
  %123 = vmatpush1.xpose.msra.mxu0 0.0
  %124 = vmatprep.subr.mxu0 0.0
  %125 = vmatpush1.xpose.msra.mxu0 0.0
  %126 = vmatprep.subr.mxu0 0.0
  %127 = vmatpush1.xpose.msra.mxu0 0.0
  %128 = vmatprep.subr.mxu0 0.0
  %129 = vmatpush1.xpose.msra.mxu0 0.0
  %130 = vmatprep.subr.mxu0 0.0
  %131 = vmatpush1.xpose.msra.mxu0 0.0
  %132 = vmatprep.subr.mxu0 0.0
  %133 = vmatpush1.xpose.msra.mxu0 0.0
  %134 = vmatprep.subr.mxu0 0.0
  %135 = vmatpush1.xpose.msra.mxu0 0.0
  %136 = vmatprep.subr.mxu0 0.0
  %137 = vmatpush1.xpose.msra.mxu0 0.0
  %138 = vmatprep.subr.mxu0 0.0
  %139 = vmatpush1.xpose.msra.mxu0 0.0
  %140 = vmatprep.subr.mxu0 0.0
  %141 = vmatpush1.xpose.msra.mxu0 0.0
  %142 = vmatprep.subr.mxu0 0.0
  %143 = vmatpush1.xpose.msra.mxu0 0.0
  %144 = vmatprep.subr.mxu0 0.0
  %145 = vmatpush1.xpose.msra.mxu0 0.0
  %146 = vmatprep.subr.mxu0 0.0
  %147 = vmatpush1.xpose.msra.mxu0 %v114
  %148 = vmatprep.subr.mxu0 0.0
  %149 = vmatpush2.xpose.msra.mxu0 0.0
  %150 = vmatprep.subr.mxu0 0.0
  %151 = vmatpush2.xpose.msra.mxu0 0.0
  %152 = vmatprep.subr.mxu0 0.0
  %153 = vmatpush2.xpose.msra.mxu0 0.0
  %154 = vmatprep.subr.mxu0 0.0
  %155 = vmatpush2.xpose.msra.mxu0 0.0
  %156 = vmatprep.subr.mxu0 0.0
  %157 = vmatpush2.xpose.msra.mxu0 0.0
  %158 = vmatprep.subr.mxu0 0.0
  %159 = vmatpush2.xpose.msra.mxu0 0.0
  %160 = vmatprep.subr.mxu0 0.0
  %161 = vmatpush2.xpose.msra.mxu0 0.0
  %162 = vmatprep.subr.mxu0 0.0
  %163 = vmatpush2.xpose.msra.mxu0 0.0
  %164 = vmatprep.subr.mxu0 0.0
  %165 = vmatpush2.xpose.msra.mxu0 0.0
  %166 = vmatprep.subr.mxu0 0.0
  %167 = vmatpush2.xpose.msra.mxu0 0.0
  %168 = vmatprep.subr.mxu0 0.0
  %169 = vmatpush2.xpose.msra.mxu0 0.0
  %170 = vmatprep.subr.mxu0 0.0
  %171 = vmatpush2.xpose.msra.mxu0 0.0
  %172 = vmatprep.subr.mxu0 0.0
  %173 = vmatpush2.xpose.msra.mxu0 0.0
  %174 = vmatprep.subr.mxu0 0.0
  %175 = vmatpush2.xpose.msra.mxu0 0.0
  %176 = vmatprep.subr.mxu0 0.0
  %177 = vmatpush2.xpose.msra.mxu0 0.0
  %178 = vmatprep.subr.mxu0 0.0
  %179 = vmatpush2.xpose.msra.mxu0 0.0
  %180 = vmatprep.mubr.f32.mxu0 0.0
  %181 = vmatmul.mubr.f32.gmra.mxu0 %v114
  %v182 = vpop.f32.mrf.mxu0
  %v183 = vadd.f32 0.0, %v182
  %v184 = vpop.f32.mrf.mxu0
  %185 = vdwg.mxu0
  %vm186 = vcmask 64512
  %v187 = vsel %vm186, %v110, -inf
  %188 = vmax.xlane.f32.xlu0 %v187
  %v189 = vpop.xlane.xlu0 %188
  %v190 = vsel %vm186, %v183, -inf
  %191 = vmax.xlane.f32.xlu0 %v190
  %v192 = vpop.xlane.xlu0 %191
  %v193 = vsub.f32 %v110, %v189
  %v194 = vsub.f32 %v183, %v192
  %v195 = vmul.f32 %v193, 1.442695
  %v196 = vpow.pop %v195
  %v197 = vmul.f32 %v194, 1.442695
  %v198 = vpow.pop %v197
  %v199 = vsel %vm186, %v196, 0.0
  %200 = vadd.xlane.f32.xlu0 %v199
  %v201 = vpop.xlane.xlu0 %200
  %v202 = vsel %vm186, %v198, 0.0
  %203 = vadd.xlane.f32.xlu0 %v202
  %v204 = vpop.xlane.xlu0 %203
  %v205 = vrcp.pop %v201
  %v206 = vrcp.pop %v204
  %v207 = vmul.f32 %v196, %v205
  %v208 = vmul.f32 %v198, %v206
  %v210 = vsel %vm39, %v37, 0
  %212 = vmatprep.subr.mxu0 0.0
  %213 = vmatpush1.xpose.msra.mxu0 0.0
  %214 = vmatprep.subr.mxu0 0.0
  %215 = vmatpush1.xpose.msra.mxu0 0.0
  %216 = vmatprep.subr.mxu0 0.0
  %217 = vmatpush1.xpose.msra.mxu0 0.0
  %218 = vmatprep.subr.mxu0 0.0
  %219 = vmatpush1.xpose.msra.mxu0 0.0
  %220 = vmatprep.subr.mxu0 0.0
  %221 = vmatpush1.xpose.msra.mxu0 0.0
  %222 = vmatprep.subr.mxu0 0.0
  %223 = vmatpush1.xpose.msra.mxu0 0.0
  %224 = vmatprep.subr.mxu0 0.0
  %225 = vmatpush1.xpose.msra.mxu0 0.0
  %226 = vmatprep.subr.mxu0 0.0
  %227 = vmatpush1.xpose.msra.mxu0 0.0
  %228 = vmatprep.subr.mxu0 0.0
  %229 = vmatpush1.xpose.msra.mxu0 0.0
  %230 = vmatprep.subr.mxu0 0.0
  %231 = vmatpush1.xpose.msra.mxu0 0.0
  %232 = vmatprep.subr.mxu0 0.0
  %233 = vmatpush1.xpose.msra.mxu0 0.0
  %234 = vmatprep.subr.mxu0 0.0
  %235 = vmatpush1.xpose.msra.mxu0 0.0
  %236 = vmatprep.subr.mxu0 0.0
  %237 = vmatpush1.xpose.msra.mxu0 0.0
  %238 = vmatprep.subr.mxu0 0.0
  %239 = vmatpush1.xpose.msra.mxu0 0.0
  %240 = vmatprep.subr.mxu0 0.0
  %241 = vmatpush1.xpose.msra.mxu0 0.0
  %242 = vmatprep.subr.mxu0 0.0
  %243 = vmatpush1.xpose.msra.mxu0 %v210
  %244 = vmatprep.subr.mxu0 0.0
  %245 = vmatpush2.xpose.msra.mxu0 0.0
  %246 = vmatprep.subr.mxu0 0.0
  %247 = vmatpush2.xpose.msra.mxu0 0.0
  %248 = vmatprep.subr.mxu0 0.0
  %249 = vmatpush2.xpose.msra.mxu0 0.0
  %250 = vmatprep.subr.mxu0 0.0
  %251 = vmatpush2.xpose.msra.mxu0 0.0
  %252 = vmatprep.subr.mxu0 0.0
  %253 = vmatpush2.xpose.msra.mxu0 0.0
  %254 = vmatprep.subr.mxu0 0.0
  %255 = vmatpush2.xpose.msra.mxu0 0.0
  %256 = vmatprep.subr.mxu0 0.0
  %257 = vmatpush2.xpose.msra.mxu0 0.0
  %258 = vmatprep.subr.mxu0 0.0
  %259 = vmatpush2.xpose.msra.mxu0 0.0
  %260 = vmatprep.subr.mxu0 0.0
  %261 = vmatpush2.xpose.msra.mxu0 0.0
  %262 = vmatprep.subr.mxu0 0.0
  %263 = vmatpush2.xpose.msra.mxu0 0.0
  %264 = vmatprep.subr.mxu0 0.0
  %265 = vmatpush2.xpose.msra.mxu0 0.0
  %266 = vmatprep.subr.mxu0 0.0
  %267 = vmatpush2.xpose.msra.mxu0 0.0
  %268 = vmatprep.subr.mxu0 0.0
  %269 = vmatpush2.xpose.msra.mxu0 0.0
  %270 = vmatprep.subr.mxu0 0.0
  %271 = vmatpush2.xpose.msra.mxu0 0.0
  %272 = vmatprep.subr.mxu0 0.0
  %273 = vmatpush2.xpose.msra.mxu0 0.0
  %274 = vmatprep.subr.mxu0 0.0
  %275 = vmatpush2.xpose.msra.mxu0 0.0
  %276 = vmatprep.mubr.f32.mxu0 0.0
  %277 = vmatmul.mubr.f32.gmra.mxu0 %v41
  %v278 = vpop.f32.mrf.mxu0
  %v279 = vadd.f32 0.0, %v278
  %v280 = vpop.f32.mrf.mxu0
  %281 = vdwg.mxu0
  %v283 = vsel %vm39, %v38, 0
  %285 = vmatprep.subr.mxu0 0.0
  %286 = vmatpush1.xpose.msra.mxu0 0.0
  %287 = vmatprep.subr.mxu0 0.0
  %288 = vmatpush1.xpose.msra.mxu0 0.0
  %289 = vmatprep.subr.mxu0 0.0
  %290 = vmatpush1.xpose.msra.mxu0 0.0
  %291 = vmatprep.subr.mxu0 0.0
  %292 = vmatpush1.xpose.msra.mxu0 0.0
  %293 = vmatprep.subr.mxu0 0.0
  %294 = vmatpush1.xpose.msra.mxu0 0.0
  %295 = vmatprep.subr.mxu0 0.0
  %296 = vmatpush1.xpose.msra.mxu0 0.0
  %297 = vmatprep.subr.mxu0 0.0
  %298 = vmatpush1.xpose.msra.mxu0 0.0
  %299 = vmatprep.subr.mxu0 0.0
  %300 = vmatpush1.xpose.msra.mxu0 0.0
  %301 = vmatprep.subr.mxu0 0.0
  %302 = vmatpush1.xpose.msra.mxu0 0.0
  %303 = vmatprep.subr.mxu0 0.0
  %304 = vmatpush1.xpose.msra.mxu0 0.0
  %305 = vmatprep.subr.mxu0 0.0
  %306 = vmatpush1.xpose.msra.mxu0 0.0
  %307 = vmatprep.subr.mxu0 0.0
  %308 = vmatpush1.xpose.msra.mxu0 0.0
  %309 = vmatprep.subr.mxu0 0.0
  %310 = vmatpush1.xpose.msra.mxu0 0.0
  %311 = vmatprep.subr.mxu0 0.0
  %312 = vmatpush1.xpose.msra.mxu0 0.0
  %313 = vmatprep.subr.mxu0 0.0
  %314 = vmatpush1.xpose.msra.mxu0 0.0
  %315 = vmatprep.subr.mxu0 0.0
  %316 = vmatpush1.xpose.msra.mxu0 %v283
  %317 = vmatprep.subr.mxu0 0.0
  %318 = vmatpush2.xpose.msra.mxu0 0.0
  %319 = vmatprep.subr.mxu0 0.0
  %320 = vmatpush2.xpose.msra.mxu0 0.0
  %321 = vmatprep.subr.mxu0 0.0
  %322 = vmatpush2.xpose.msra.mxu0 0.0
  %323 = vmatprep.subr.mxu0 0.0
  %324 = vmatpush2.xpose.msra.mxu0 0.0
  %325 = vmatprep.subr.mxu0 0.0
  %326 = vmatpush2.xpose.msra.mxu0 0.0
  %327 = vmatprep.subr.mxu0 0.0
  %328 = vmatpush2.xpose.msra.mxu0 0.0
  %329 = vmatprep.subr.mxu0 0.0
  %330 = vmatpush2.xpose.msra.mxu0 0.0
  %331 = vmatprep.subr.mxu0 0.0
  %332 = vmatpush2.xpose.msra.mxu0 0.0
  %333 = vmatprep.subr.mxu0 0.0
  %334 = vmatpush2.xpose.msra.mxu0 0.0
  %335 = vmatprep.subr.mxu0 0.0
  %336 = vmatpush2.xpose.msra.mxu0 0.0
  %337 = vmatprep.subr.mxu0 0.0
  %338 = vmatpush2.xpose.msra.mxu0 0.0
  %339 = vmatprep.subr.mxu0 0.0
  %340 = vmatpush2.xpose.msra.mxu0 0.0
  %341 = vmatprep.subr.mxu0 0.0
  %342 = vmatpush2.xpose.msra.mxu0 0.0
  %343 = vmatprep.subr.mxu0 0.0
  %344 = vmatpush2.xpose.msra.mxu0 0.0
  %345 = vmatprep.subr.mxu0 0.0
  %346 = vmatpush2.xpose.msra.mxu0 0.0
  %347 = vmatprep.subr.mxu0 0.0
  %348 = vmatpush2.xpose.msra.mxu0 0.0
  %349 = vmatprep.mubr.f32.mxu0 0.0
  %350 = vmatmul.mubr.f32.gmra.mxu0 %v114
  %v351 = vpop.f32.mrf.mxu0
  %v352 = vadd.f32 0.0, %v351
  %v353 = vpop.f32.mrf.mxu0
  %354 = vdwg.mxu0
  %vm355 = vcmask 31744
  %v356 = vsel %vm355, %v279, -inf
  %357 = vmax.xlane.f32.xlu0 %v356
  %v358 = vpop.xlane.xlu0 %357
  %v359 = vsel %vm355, %v352, -inf
  %360 = vmax.xlane.f32.xlu0 %v359
  %v361 = vpop.xlane.xlu0 %360
  %v362 = vsub.f32 %v279, %v358
  %v363 = vsub.f32 %v352, %v361
  %v364 = vmul.f32 %v362, 1.442695
  %v365 = vpow.pop %v364
  %v366 = vmul.f32 %v363, 1.442695
  %v367 = vpow.pop %v366
  %v368 = vsel %vm355, %v365, 0.0
  %369 = vadd.xlane.f32.xlu0 %v368
  %v370 = vpop.xlane.xlu0 %369
  %v371 = vsel %vm355, %v367, 0.0
  %372 = vadd.xlane.f32.xlu0 %v371
  %v373 = vpop.xlane.xlu0 %372
  %v374 = vrcp.pop %v370
  %v375 = vrcp.pop %v373
  %v376 = vmul.f32 %v365, %v374
  %v377 = vmul.f32 %v367, %v375
  %v378 = vsel %vm186, %v207, 0.0
  %379 = vadd.xlane.f32.xlu0 %v378
  %v380 = vpop.xlane.xlu0 %379
  %v381 = vsel %vm186, %v208, 0.0
  %382 = vadd.xlane.f32.xlu0 %v381
  %v383 = vpop.xlane.xlu0 %382
  %v384 = vadd.f32 %v380, 1.0
  %v385 = vadd.f32 %v383, 1.0
  %v386 = vrot.slane %v378, 4
  %v387 = vadd.f32 %v378, %v386
  %v388 = vrot.slane %v387, 2
  %v389 = vadd.f32 %v387, %v388
  %v390 = vrot.slane %v389, 1
  %v391 = vadd.f32 %v389, %v390
  %v392 = vrot.slane %v381, 4
  %v393 = vadd.f32 %v381, %v392
  %v394 = vrot.slane %v393, 2
  %v395 = vadd.f32 %v393, %v394
  %v396 = vrot.slane %v395, 1
  %v397 = vadd.f32 %v395, %v396
  %v398 = vadd.f32 %v391, 1.0
  %v399 = vadd.f32 %v397, 1.0
  %vm400 = vcmp.gt.f32.partialorder %v384, 0.0
  %vm401 = vcmp.gt.f32.partialorder %v385, 0.0
  %v402 = vrsqrt.pop %v384
  %v403 = vrsqrt.pop %v385
  %v404 = vsel %vm400, %v402, 0.0
  %v405 = vsel %vm401, %v403, 0.0
  %vm406 = vcmp.gt.f32.partialorder %v398, 0.0
  %vm407 = vcmp.gt.f32.partialorder %v399, 0.0
  %v408 = vrsqrt.pop %v398
  %v409 = vrsqrt.pop %v399
  %v410 = vsel %vm406, %v408, 0.0
  %v411 = vsel %vm407, %v409, 0.0
  %v412 = vmul.f32 %v207, %v410
  %v413 = vmul.f32 %v208, %v411
  %v415 = vsel %vm186, %v412, 0
  %417 = vmatprep.subr.mxu0 0.0
  %418 = vmatpush1.msra.mxu0 0.0
  %419 = vmatprep.subr.mxu0 0.0
  %420 = vmatpush1.msra.mxu0 0.0
  %421 = vmatprep.subr.mxu0 0.0
  %422 = vmatpush1.msra.mxu0 0.0
  %423 = vmatprep.subr.mxu0 0.0
  %424 = vmatpush1.msra.mxu0 0.0
  %425 = vmatprep.subr.mxu0 0.0
  %426 = vmatpush1.msra.mxu0 0.0
  %427 = vmatprep.subr.mxu0 0.0
  %428 = vmatpush1.msra.mxu0 0.0
  %429 = vmatprep.subr.mxu0 0.0
  %430 = vmatpush1.msra.mxu0 0.0
  %431 = vmatprep.subr.mxu0 0.0
  %432 = vmatpush1.msra.mxu0 0.0
  %433 = vmatprep.subr.mxu0 0.0
  %434 = vmatpush1.msra.mxu0 0.0
  %435 = vmatprep.subr.mxu0 0.0
  %436 = vmatpush1.msra.mxu0 0.0
  %437 = vmatprep.subr.mxu0 0.0
  %438 = vmatpush1.msra.mxu0 0.0
  %439 = vmatprep.subr.mxu0 0.0
  %440 = vmatpush1.msra.mxu0 0.0
  %441 = vmatprep.subr.mxu0 0.0
  %442 = vmatpush1.msra.mxu0 0.0
  %443 = vmatprep.subr.mxu0 0.0
  %444 = vmatpush1.msra.mxu0 0.0
  %445 = vmatprep.subr.mxu0 0.0
  %446 = vmatpush1.msra.mxu0 0.0
  %447 = vmatprep.subr.mxu0 0.0
  %448 = vmatpush1.msra.mxu0 %v35
  %449 = vmatprep.subr.mxu0 0.0
  %450 = vmatpush2.msra.mxu0 0.0
  %451 = vmatprep.subr.mxu0 0.0
  %452 = vmatpush2.msra.mxu0 0.0
  %453 = vmatprep.subr.mxu0 0.0
  %454 = vmatpush2.msra.mxu0 0.0
  %455 = vmatprep.subr.mxu0 0.0
  %456 = vmatpush2.msra.mxu0 0.0
  %457 = vmatprep.subr.mxu0 0.0
  %458 = vmatpush2.msra.mxu0 0.0
  %459 = vmatprep.subr.mxu0 0.0
  %460 = vmatpush2.msra.mxu0 0.0
  %461 = vmatprep.subr.mxu0 0.0
  %462 = vmatpush2.msra.mxu0 0.0
  %463 = vmatprep.subr.mxu0 0.0
  %464 = vmatpush2.msra.mxu0 0.0
  %465 = vmatprep.subr.mxu0 0.0
  %466 = vmatpush2.msra.mxu0 0.0
  %467 = vmatprep.subr.mxu0 0.0
  %468 = vmatpush2.msra.mxu0 0.0
  %469 = vmatprep.subr.mxu0 0.0
  %470 = vmatpush2.msra.mxu0 0.0
  %471 = vmatprep.subr.mxu0 0.0
  %472 = vmatpush2.msra.mxu0 0.0
  %473 = vmatprep.subr.mxu0 0.0
  %474 = vmatpush2.msra.mxu0 0.0
  %475 = vmatprep.subr.mxu0 0.0
  %476 = vmatpush2.msra.mxu0 0.0
  %477 = vmatprep.subr.mxu0 0.0
  %478 = vmatpush2.msra.mxu0 0.0
  %479 = vmatprep.subr.mxu0 0.0
  %480 = vmatpush2.msra.mxu0 0.0
  %481 = vmatprep.mubr.f32.mxu0 0.0
  %482 = vmatmul.mubr.f32.gmra.mxu0 %v415
  %v483 = vpop.f32.mrf.mxu0
  %v484 = vadd.f32 0.0, %v483
  %v485 = vpop.f32.mrf.mxu0
  %486 = vdwg.mxu0
  %v488 = vsel %vm186, %v413, 0
  %490 = vmatprep.subr.mxu0 0.0
  %491 = vmatpush1.msra.mxu0 0.0
  %492 = vmatprep.subr.mxu0 0.0
  %493 = vmatpush1.msra.mxu0 0.0
  %494 = vmatprep.subr.mxu0 0.0
  %495 = vmatpush1.msra.mxu0 0.0
  %496 = vmatprep.subr.mxu0 0.0
  %497 = vmatpush1.msra.mxu0 0.0
  %498 = vmatprep.subr.mxu0 0.0
  %499 = vmatpush1.msra.mxu0 0.0
  %500 = vmatprep.subr.mxu0 0.0
  %501 = vmatpush1.msra.mxu0 0.0
  %502 = vmatprep.subr.mxu0 0.0
  %503 = vmatpush1.msra.mxu0 0.0
  %504 = vmatprep.subr.mxu0 0.0
  %505 = vmatpush1.msra.mxu0 0.0
  %506 = vmatprep.subr.mxu0 0.0
  %507 = vmatpush1.msra.mxu0 0.0
  %508 = vmatprep.subr.mxu0 0.0
  %509 = vmatpush1.msra.mxu0 0.0
  %510 = vmatprep.subr.mxu0 0.0
  %511 = vmatpush1.msra.mxu0 0.0
  %512 = vmatprep.subr.mxu0 0.0
  %513 = vmatpush1.msra.mxu0 0.0
  %514 = vmatprep.subr.mxu0 0.0
  %515 = vmatpush1.msra.mxu0 0.0
  %516 = vmatprep.subr.mxu0 0.0
  %517 = vmatpush1.msra.mxu0 0.0
  %518 = vmatprep.subr.mxu0 0.0
  %519 = vmatpush1.msra.mxu0 0.0
  %520 = vmatprep.subr.mxu0 0.0
  %521 = vmatpush1.msra.mxu0 %v36
  %522 = vmatprep.subr.mxu0 0.0
  %523 = vmatpush2.msra.mxu0 0.0
  %524 = vmatprep.subr.mxu0 0.0
  %525 = vmatpush2.msra.mxu0 0.0
  %526 = vmatprep.subr.mxu0 0.0
  %527 = vmatpush2.msra.mxu0 0.0
  %528 = vmatprep.subr.mxu0 0.0
  %529 = vmatpush2.msra.mxu0 0.0
  %530 = vmatprep.subr.mxu0 0.0
  %531 = vmatpush2.msra.mxu0 0.0
  %532 = vmatprep.subr.mxu0 0.0
  %533 = vmatpush2.msra.mxu0 0.0
  %534 = vmatprep.subr.mxu0 0.0
  %535 = vmatpush2.msra.mxu0 0.0
  %536 = vmatprep.subr.mxu0 0.0
  %537 = vmatpush2.msra.mxu0 0.0
  %538 = vmatprep.subr.mxu0 0.0
  %539 = vmatpush2.msra.mxu0 0.0
  %540 = vmatprep.subr.mxu0 0.0
  %541 = vmatpush2.msra.mxu0 0.0
  %542 = vmatprep.subr.mxu0 0.0
  %543 = vmatpush2.msra.mxu0 0.0
  %544 = vmatprep.subr.mxu0 0.0
  %545 = vmatpush2.msra.mxu0 0.0
  %546 = vmatprep.subr.mxu0 0.0
  %547 = vmatpush2.msra.mxu0 0.0
  %548 = vmatprep.subr.mxu0 0.0
  %549 = vmatpush2.msra.mxu0 0.0
  %550 = vmatprep.subr.mxu0 0.0
  %551 = vmatpush2.msra.mxu0 0.0
  %552 = vmatprep.subr.mxu0 0.0
  %553 = vmatpush2.msra.mxu0 0.0
  %554 = vmatprep.mubr.f32.mxu0 0.0
  %555 = vmatmul.mubr.f32.gmra.mxu0 %v488
  %v556 = vpop.f32.mrf.mxu0
  %v557 = vadd.f32 0.0, %v556
  %v558 = vpop.f32.mrf.mxu0
  %559 = vdwg.mxu0
  %v560 = vmul.f32 %v404, %v404
  %v561 = vmul.f32 %v405, %v405
  %v562 = vmul.f32 %v560, %v35
  %v563 = vmul.f32 %v561, %v36
  %v564 = vmul.f32 %v404, %v484
  %v565 = vmul.f32 %v405, %v557
  %v566 = vadd.f32 %v562, %v564
  %v567 = vadd.f32 %v563, %v565
  %v568 = vsel %vm355, %v376, 0.0
  %569 = vadd.xlane.f32.xlu0 %v568
  %v570 = vpop.xlane.xlu0 %569
  %v571 = vsel %vm355, %v377, 0.0
  %572 = vadd.xlane.f32.xlu0 %v571
  %v573 = vpop.xlane.xlu0 %572
  %v574 = vadd.f32 %v570, 1.0
  %v575 = vadd.f32 %v573, 1.0
  %v576 = vrot.slane %v568, 4
  %v577 = vadd.f32 %v568, %v576
  %v578 = vrot.slane %v577, 2
  %v579 = vadd.f32 %v577, %v578
  %v580 = vrot.slane %v579, 1
  %v581 = vadd.f32 %v579, %v580
  %v582 = vrot.slane %v571, 4
  %v583 = vadd.f32 %v571, %v582
  %v584 = vrot.slane %v583, 2
  %v585 = vadd.f32 %v583, %v584
  %v586 = vrot.slane %v585, 1
  %v587 = vadd.f32 %v585, %v586
  %v588 = vadd.f32 %v581, 1.0
  %v589 = vadd.f32 %v587, 1.0
  %vm590 = vcmp.gt.f32.partialorder %v574, 0.0
  %vm591 = vcmp.gt.f32.partialorder %v575, 0.0
  %v592 = vrsqrt.pop %v574
  %v593 = vrsqrt.pop %v575
  %v594 = vsel %vm590, %v592, 0.0
  %v595 = vsel %vm591, %v593, 0.0
  %vm596 = vcmp.gt.f32.partialorder %v588, 0.0
  %vm597 = vcmp.gt.f32.partialorder %v589, 0.0
  %v598 = vrsqrt.pop %v588
  %v599 = vrsqrt.pop %v589
  %v600 = vsel %vm596, %v598, 0.0
  %v601 = vsel %vm597, %v599, 0.0
  %v602 = vmul.f32 %v376, %v600
  %v603 = vmul.f32 %v377, %v601
  %v605 = vsel %vm355, %v602, 0
  %vm607 = vcmask 1043456
  %v608 = vsel %vm607, %v37, 0
  %610 = vmatprep.subr.mxu0 0.0
  %611 = vmatpush1.msra.mxu0 0.0
  %612 = vmatprep.subr.mxu0 0.0
  %613 = vmatpush1.msra.mxu0 0.0
  %614 = vmatprep.subr.mxu0 0.0
  %615 = vmatpush1.msra.mxu0 0.0
  %616 = vmatprep.subr.mxu0 0.0
  %617 = vmatpush1.msra.mxu0 0.0
  %618 = vmatprep.subr.mxu0 0.0
  %619 = vmatpush1.msra.mxu0 0.0
  %620 = vmatprep.subr.mxu0 0.0
  %621 = vmatpush1.msra.mxu0 0.0
  %622 = vmatprep.subr.mxu0 0.0
  %623 = vmatpush1.msra.mxu0 0.0
  %624 = vmatprep.subr.mxu0 0.0
  %625 = vmatpush1.msra.mxu0 0.0
  %626 = vmatprep.subr.mxu0 0.0
  %627 = vmatpush1.msra.mxu0 0.0
  %628 = vmatprep.subr.mxu0 0.0
  %629 = vmatpush1.msra.mxu0 0.0
  %630 = vmatprep.subr.mxu0 0.0
  %631 = vmatpush1.msra.mxu0 0.0
  %632 = vmatprep.subr.mxu0 0.0
  %633 = vmatpush1.msra.mxu0 0.0
  %634 = vmatprep.subr.mxu0 0.0
  %635 = vmatpush1.msra.mxu0 0.0
  %636 = vmatprep.subr.mxu0 0.0
  %637 = vmatpush1.msra.mxu0 0.0
  %638 = vmatprep.subr.mxu0 0.0
  %639 = vmatpush1.msra.mxu0 0.0
  %640 = vmatprep.subr.mxu0 0.0
  %641 = vmatpush1.msra.mxu0 %v608
  %642 = vmatprep.subr.mxu0 0.0
  %643 = vmatpush2.msra.mxu0 0.0
  %644 = vmatprep.subr.mxu0 0.0
  %645 = vmatpush2.msra.mxu0 0.0
  %646 = vmatprep.subr.mxu0 0.0
  %647 = vmatpush2.msra.mxu0 0.0
  %648 = vmatprep.subr.mxu0 0.0
  %649 = vmatpush2.msra.mxu0 0.0
  %650 = vmatprep.subr.mxu0 0.0
  %651 = vmatpush2.msra.mxu0 0.0
  %652 = vmatprep.subr.mxu0 0.0
  %653 = vmatpush2.msra.mxu0 0.0
  %654 = vmatprep.subr.mxu0 0.0
  %655 = vmatpush2.msra.mxu0 0.0
  %656 = vmatprep.subr.mxu0 0.0
  %657 = vmatpush2.msra.mxu0 0.0
  %658 = vmatprep.subr.mxu0 0.0
  %659 = vmatpush2.msra.mxu0 0.0
  %660 = vmatprep.subr.mxu0 0.0
  %661 = vmatpush2.msra.mxu0 0.0
  %662 = vmatprep.subr.mxu0 0.0
  %663 = vmatpush2.msra.mxu0 0.0
  %664 = vmatprep.subr.mxu0 0.0
  %665 = vmatpush2.msra.mxu0 0.0
  %666 = vmatprep.subr.mxu0 0.0
  %667 = vmatpush2.msra.mxu0 0.0
  %668 = vmatprep.subr.mxu0 0.0
  %669 = vmatpush2.msra.mxu0 0.0
  %670 = vmatprep.subr.mxu0 0.0
  %671 = vmatpush2.msra.mxu0 0.0
  %672 = vmatprep.subr.mxu0 0.0
  %673 = vmatpush2.msra.mxu0 0.0
  %674 = vmatprep.mubr.f32.mxu0 0.0
  %675 = vmatmul.mubr.f32.gmra.mxu0 %v605
  %v676 = vpop.f32.mrf.mxu0
  %v677 = vadd.f32 0.0, %v676
  %v678 = vpop.f32.mrf.mxu0
  %679 = vdwg.mxu0
  %v681 = vsel %vm355, %v603, 0
  %v683 = vsel %vm607, %v38, 0
  %685 = vmatprep.subr.mxu0 0.0
  %686 = vmatpush1.msra.mxu0 0.0
  %687 = vmatprep.subr.mxu0 0.0
  %688 = vmatpush1.msra.mxu0 0.0
  %689 = vmatprep.subr.mxu0 0.0
  %690 = vmatpush1.msra.mxu0 0.0
  %691 = vmatprep.subr.mxu0 0.0
  %692 = vmatpush1.msra.mxu0 0.0
  %693 = vmatprep.subr.mxu0 0.0
  %694 = vmatpush1.msra.mxu0 0.0
  %695 = vmatprep.subr.mxu0 0.0
  %696 = vmatpush1.msra.mxu0 0.0
  %697 = vmatprep.subr.mxu0 0.0
  %698 = vmatpush1.msra.mxu0 0.0
  %699 = vmatprep.subr.mxu0 0.0
  %700 = vmatpush1.msra.mxu0 0.0
  %701 = vmatprep.subr.mxu0 0.0
  %702 = vmatpush1.msra.mxu0 0.0
  %703 = vmatprep.subr.mxu0 0.0
  %704 = vmatpush1.msra.mxu0 0.0
  %705 = vmatprep.subr.mxu0 0.0
  %706 = vmatpush1.msra.mxu0 0.0
  %707 = vmatprep.subr.mxu0 0.0
  %708 = vmatpush1.msra.mxu0 0.0
  %709 = vmatprep.subr.mxu0 0.0
  %710 = vmatpush1.msra.mxu0 0.0
  %711 = vmatprep.subr.mxu0 0.0
  %712 = vmatpush1.msra.mxu0 0.0
  %713 = vmatprep.subr.mxu0 0.0
  %714 = vmatpush1.msra.mxu0 0.0
  %715 = vmatprep.subr.mxu0 0.0
  %716 = vmatpush1.msra.mxu0 %v683
  %717 = vmatprep.subr.mxu0 0.0
  %718 = vmatpush2.msra.mxu0 0.0
  %719 = vmatprep.subr.mxu0 0.0
  %720 = vmatpush2.msra.mxu0 0.0
  %721 = vmatprep.subr.mxu0 0.0
  %722 = vmatpush2.msra.mxu0 0.0
  %723 = vmatprep.subr.mxu0 0.0
  %724 = vmatpush2.msra.mxu0 0.0
  %725 = vmatprep.subr.mxu0 0.0
  %726 = vmatpush2.msra.mxu0 0.0
  %727 = vmatprep.subr.mxu0 0.0
  %728 = vmatpush2.msra.mxu0 0.0
  %729 = vmatprep.subr.mxu0 0.0
  %730 = vmatpush2.msra.mxu0 0.0
  %731 = vmatprep.subr.mxu0 0.0
  %732 = vmatpush2.msra.mxu0 0.0
  %733 = vmatprep.subr.mxu0 0.0
  %734 = vmatpush2.msra.mxu0 0.0
  %735 = vmatprep.subr.mxu0 0.0
  %736 = vmatpush2.msra.mxu0 0.0
  %737 = vmatprep.subr.mxu0 0.0
  %738 = vmatpush2.msra.mxu0 0.0
  %739 = vmatprep.subr.mxu0 0.0
  %740 = vmatpush2.msra.mxu0 0.0
  %741 = vmatprep.subr.mxu0 0.0
  %742 = vmatpush2.msra.mxu0 0.0
  %743 = vmatprep.subr.mxu0 0.0
  %744 = vmatpush2.msra.mxu0 0.0
  %745 = vmatprep.subr.mxu0 0.0
  %746 = vmatpush2.msra.mxu0 0.0
  %747 = vmatprep.subr.mxu0 0.0
  %748 = vmatpush2.msra.mxu0 0.0
  %749 = vmatprep.mubr.f32.mxu0 0.0
  %750 = vmatmul.mubr.f32.gmra.mxu0 %v681
  %v751 = vpop.f32.mrf.mxu0
  %v752 = vadd.f32 0.0, %v751
  %v753 = vpop.f32.mrf.mxu0
  %754 = vdwg.mxu0
  %v755 = vmul.f32 %v594, %v594
  %v756 = vmul.f32 %v595, %v595
  %v757 = vmul.f32 %v755, %v35
  %v758 = vmul.f32 %v756, %v36
  %v759 = vmul.f32 %v594, %v677
  %v760 = vmul.f32 %v595, %v752
  %v761 = vadd.f32 %v757, %v759
  %v762 = vadd.f32 %v758, %v760
  %v763 = vld [vmem:[%s2] sm:$0xff]
  %v764 = vld [vmem:[%s2 + $0x8] sm:$0xff]
  %v765 = vld [vmem:[%s2 + $0x10] sm:$0xff]
  %v766 = vld [vmem:[%s2 + $0x18] sm:$0xff]
  %v767 = vld [vmem:[%s3] sm:$0x1]
  %v769 = vlaneseq
  %v770 = vshrl.u32 %v769, 7
  %v771 = vsub.s32 0, %v770
  %v772 = vrot.slane %v767, %v771
  %v775 = vsel %vm39, %v566, 0
  %v778 = vsel %vm39, %v567, 0
  %780 = vmatprep.subr.mxu0 0.0
  %781 = vmatpush1.msra.mxu0 0.0
  %782 = vmatprep.subr.mxu0 0.0
  %783 = vmatpush1.msra.mxu0 0.0
  %784 = vmatprep.subr.mxu0 0.0
  %785 = vmatpush1.msra.mxu0 0.0
  %786 = vmatprep.subr.mxu0 0.0
  %787 = vmatpush1.msra.mxu0 0.0
  %788 = vmatprep.subr.mxu0 0.0
  %789 = vmatpush1.msra.mxu0 0.0
  %790 = vmatprep.subr.mxu0 0.0
  %791 = vmatpush1.msra.mxu0 0.0
  %792 = vmatprep.subr.mxu0 0.0
  %793 = vmatpush1.msra.mxu0 0.0
  %794 = vmatprep.subr.mxu0 0.0
  %795 = vmatpush1.msra.mxu0 0.0
  %796 = vmatprep.subr.mxu0 0.0
  %797 = vmatpush1.msra.mxu0 0.0
  %798 = vmatprep.subr.mxu0 0.0
  %799 = vmatpush1.msra.mxu0 0.0
  %800 = vmatprep.subr.mxu0 0.0
  %801 = vmatpush1.msra.mxu0 0.0
  %802 = vmatprep.subr.mxu0 0.0
  %803 = vmatpush1.msra.mxu0 0.0
  %804 = vmatprep.subr.mxu0 0.0
  %805 = vmatpush1.msra.mxu0 %v766
  %806 = vmatprep.subr.mxu0 0.0
  %807 = vmatpush1.msra.mxu0 %v765
  %808 = vmatprep.subr.mxu0 0.0
  %809 = vmatpush1.msra.mxu0 %v764
  %810 = vmatprep.subr.mxu0 0.0
  %811 = vmatpush1.msra.mxu0 %v763
  %812 = vmatprep.subr.mxu0 0.0
  %813 = vmatpush2.msra.mxu0 0.0
  %814 = vmatprep.subr.mxu0 0.0
  %815 = vmatpush2.msra.mxu0 0.0
  %816 = vmatprep.subr.mxu0 0.0
  %817 = vmatpush2.msra.mxu0 0.0
  %818 = vmatprep.subr.mxu0 0.0
  %819 = vmatpush2.msra.mxu0 0.0
  %820 = vmatprep.subr.mxu0 0.0
  %821 = vmatpush2.msra.mxu0 0.0
  %822 = vmatprep.subr.mxu0 0.0
  %823 = vmatpush2.msra.mxu0 0.0
  %824 = vmatprep.subr.mxu0 0.0
  %825 = vmatpush2.msra.mxu0 0.0
  %826 = vmatprep.subr.mxu0 0.0
  %827 = vmatpush2.msra.mxu0 0.0
  %828 = vmatprep.subr.mxu0 0.0
  %829 = vmatpush2.msra.mxu0 0.0
  %830 = vmatprep.subr.mxu0 0.0
  %831 = vmatpush2.msra.mxu0 0.0
  %832 = vmatprep.subr.mxu0 0.0
  %833 = vmatpush2.msra.mxu0 0.0
  %834 = vmatprep.subr.mxu0 0.0
  %835 = vmatpush2.msra.mxu0 0.0
  %836 = vmatprep.subr.mxu0 0.0
  %837 = vmatpush2.msra.mxu0 0.0
  %838 = vmatprep.subr.mxu0 0.0
  %839 = vmatpush2.msra.mxu0 0.0
  %840 = vmatprep.subr.mxu0 0.0
  %841 = vmatpush2.msra.mxu0 0.0
  %842 = vmatprep.subr.mxu0 0.0
  %843 = vmatpush2.msra.mxu0 0.0
  %844 = vmatprep.mubr.f32.mxu0 0.0
  %845 = vmatmul.mubr.f32.gmra.mxu0 %v775
  %v846 = vpop.f32.mrf.mxu0
  %v847 = vadd.f32 %v772, %v846
  %v848 = vpop.f32.mrf.mxu0
  %849 = vmatprep.mubr.f32.mxu0 0.0
  %850 = vmatmul.mubr.f32.gmra.mxu0 %v778
  %v851 = vpop.f32.mrf.mxu0
  %v852 = vadd.f32 %v772, %v851
  %v853 = vpop.f32.mrf.mxu0
  %854 = vdwg.mxu0
  %v855 = vld [vmem:[%s4] sm:$0xff]
  %v856 = vld [vmem:[%s4 + $0x8] sm:$0xff]
  %v857 = vld [vmem:[%s4 + $0x10] sm:$0xff]
  %v858 = vld [vmem:[%s4 + $0x18] sm:$0xff]
  %v859 = vld [vmem:[%s5] sm:$0x1]
  %v861 = vlaneseq
  %v862 = vshrl.u32 %v861, 7
  %v863 = vsub.s32 0, %v862
  %v864 = vrot.slane %v859, %v863
  %v867 = vsel %vm39, %v761, 0
  %v870 = vsel %vm39, %v762, 0
  %872 = vmatprep.subr.mxu0 0.0
  %873 = vmatpush1.msra.mxu0 0.0
  %874 = vmatprep.subr.mxu0 0.0
  %875 = vmatpush1.msra.mxu0 0.0
  %876 = vmatprep.subr.mxu0 0.0
  %877 = vmatpush1.msra.mxu0 0.0
  %878 = vmatprep.subr.mxu0 0.0
  %879 = vmatpush1.msra.mxu0 0.0
  %880 = vmatprep.subr.mxu0 0.0
  %881 = vmatpush1.msra.mxu0 0.0
  %882 = vmatprep.subr.mxu0 0.0
  %883 = vmatpush1.msra.mxu0 0.0
  %884 = vmatprep.subr.mxu0 0.0
  %885 = vmatpush1.msra.mxu0 0.0
  %886 = vmatprep.subr.mxu0 0.0
  %887 = vmatpush1.msra.mxu0 0.0
  %888 = vmatprep.subr.mxu0 0.0
  %889 = vmatpush1.msra.mxu0 0.0
  %890 = vmatprep.subr.mxu0 0.0
  %891 = vmatpush1.msra.mxu0 0.0
  %892 = vmatprep.subr.mxu0 0.0
  %893 = vmatpush1.msra.mxu0 0.0
  %894 = vmatprep.subr.mxu0 0.0
  %895 = vmatpush1.msra.mxu0 0.0
  %896 = vmatprep.subr.mxu0 0.0
  %897 = vmatpush1.msra.mxu0 %v858
  %898 = vmatprep.subr.mxu0 0.0
  %899 = vmatpush1.msra.mxu0 %v857
  %900 = vmatprep.subr.mxu0 0.0
  %901 = vmatpush1.msra.mxu0 %v856
  %902 = vmatprep.subr.mxu0 0.0
  %903 = vmatpush1.msra.mxu0 %v855
  %904 = vmatprep.subr.mxu0 0.0
  %905 = vmatpush2.msra.mxu0 0.0
  %906 = vmatprep.subr.mxu0 0.0
  %907 = vmatpush2.msra.mxu0 0.0
  %908 = vmatprep.subr.mxu0 0.0
  %909 = vmatpush2.msra.mxu0 0.0
  %910 = vmatprep.subr.mxu0 0.0
  %911 = vmatpush2.msra.mxu0 0.0
  %912 = vmatprep.subr.mxu0 0.0
  %913 = vmatpush2.msra.mxu0 0.0
  %914 = vmatprep.subr.mxu0 0.0
  %915 = vmatpush2.msra.mxu0 0.0
  %916 = vmatprep.subr.mxu0 0.0
  %917 = vmatpush2.msra.mxu0 0.0
  %918 = vmatprep.subr.mxu0 0.0
  %919 = vmatpush2.msra.mxu0 0.0
  %920 = vmatprep.subr.mxu0 0.0
  %921 = vmatpush2.msra.mxu0 0.0
  %922 = vmatprep.subr.mxu0 0.0
  %923 = vmatpush2.msra.mxu0 0.0
  %924 = vmatprep.subr.mxu0 0.0
  %925 = vmatpush2.msra.mxu0 0.0
  %926 = vmatprep.subr.mxu0 0.0
  %927 = vmatpush2.msra.mxu0 0.0
  %928 = vmatprep.subr.mxu0 0.0
  %929 = vmatpush2.msra.mxu0 0.0
  %930 = vmatprep.subr.mxu0 0.0
  %931 = vmatpush2.msra.mxu0 0.0
  %932 = vmatprep.subr.mxu0 0.0
  %933 = vmatpush2.msra.mxu0 0.0
  %934 = vmatprep.subr.mxu0 0.0
  %935 = vmatpush2.msra.mxu0 0.0
  %936 = vmatprep.mubr.f32.mxu0 0.0
  %937 = vmatmul.mubr.f32.gmra.mxu0 %v867
  %v938 = vpop.f32.mrf.mxu0
  %v939 = vadd.f32 %v864, %v938
  %v940 = vpop.f32.mrf.mxu0
  %941 = vmatprep.mubr.f32.mxu0 0.0
  %942 = vmatmul.mubr.f32.gmra.mxu0 %v870
  %v943 = vpop.f32.mrf.mxu0
  %v944 = vadd.f32 %v864, %v943
  %v945 = vpop.f32.mrf.mxu0
  %946 = vdwg.mxu0
  %949 = vrot.lane.b32.xlu0 %v847, 32
  %v950 = vpop.permute.xlu0 %949
  %951 = vrot.lane.b32.xlu0 %v852, 32
  %v952 = vpop.permute.xlu0 %951
  %957 = vrot.lane.b32.xlu0 %v939, 48
  %v958 = vpop.permute.xlu0 %957
  %959 = vrot.lane.b32.xlu0 %v944, 48
  %v960 = vpop.permute.xlu0 %959
  %v963 = vsel %vm39, %v35, %v950
  %v964 = vsel %vm39, %v36, %v952
  %vm965 = vcmask 392192
  %v966 = vsel %vm965, %v963, %v958
  %v967 = vsel %vm965, %v964, %v960
  %v968 = vld [vmem:[%s6] sm:$0xff]
  %v969 = vld [vmem:[%s6 + $0x8] sm:$0xff]
  %v970 = vld [vmem:[%s6 + $0x10] sm:$0xff]
  %v971 = vld [vmem:[%s6 + $0x18] sm:$0xff]
  %v972 = vld [vmem:[%s6 + $0x20] sm:$0xff]
  %v973 = vld [vmem:[%s6 + $0x28] sm:$0xff]
  %v974 = vld [vmem:[%s6 + $0x30] sm:$0xff]
  %v975 = vld [vmem:[%s6 + $0x38] sm:$0xff]
  %v976 = vld [vmem:[%s6 + $0x40] sm:$0xff]
  %v977 = vld [vmem:[%s6 + $0x48] sm:$0xff]
  %v978 = vld [vmem:[%s6 + $0x50] sm:$0xff]
  %v979 = vld [vmem:[%s6 + $0x58] sm:$0xff]
  %v980 = vld [vmem:[%s6 + $0x60] sm:$0xff]
  %v981 = vld [vmem:[%s6 + $0x68] sm:$0xff]
  %v982 = vld [vmem:[%s6 + $0x70] sm:$0xff]
  %v983 = vld [vmem:[%s6 + $0x78] sm:$0xff]
  %v984 = vld [vmem:[%s7] sm:$0x1]
  %v986 = vlaneseq
  %v987 = vshrl.u32 %v986, 7
  %v988 = vsub.s32 0, %v987
  %v989 = vrot.slane %v984, %v988
  %vm991 = vcmask 523264
  %v993 = vsel %vm991, %v966, 0
  %v996 = vsel %vm991, %v967, 0
  %998 = vmatprep.subr.mxu0 0.0
  %999 = vmatpush1.msra.mxu0 0.0
  %1000 = vmatprep.subr.mxu0 0.0
  %1001 = vmatpush1.msra.mxu0 0.0
  %1002 = vmatprep.subr.mxu0 0.0
  %1003 = vmatpush1.msra.mxu0 0.0
  %1004 = vmatprep.subr.mxu0 0.0
  %1005 = vmatpush1.msra.mxu0 0.0
  %1006 = vmatprep.subr.mxu0 0.0
  %1007 = vmatpush1.msra.mxu0 0.0
  %1008 = vmatprep.subr.mxu0 0.0
  %1009 = vmatpush1.msra.mxu0 0.0
  %1010 = vmatprep.subr.mxu0 0.0
  %1011 = vmatpush1.msra.mxu0 0.0
  %1012 = vmatprep.subr.mxu0 0.0
  %1013 = vmatpush1.msra.mxu0 0.0
  %1014 = vmatprep.subr.mxu0 0.0
  %1015 = vmatpush1.msra.mxu0 %v975
  %1016 = vmatprep.subr.mxu0 0.0
  %1017 = vmatpush1.msra.mxu0 %v974
  %1018 = vmatprep.subr.mxu0 0.0
  %1019 = vmatpush1.msra.mxu0 %v973
  %1020 = vmatprep.subr.mxu0 0.0
  %1021 = vmatpush1.msra.mxu0 %v972
  %1022 = vmatprep.subr.mxu0 0.0
  %1023 = vmatpush1.msra.mxu0 %v971
  %1024 = vmatprep.subr.mxu0 0.0
  %1025 = vmatpush1.msra.mxu0 %v970
  %1026 = vmatprep.subr.mxu0 0.0
  %1027 = vmatpush1.msra.mxu0 %v969
  %1028 = vmatprep.subr.mxu0 0.0
  %1029 = vmatpush1.msra.mxu0 %v968
  %1030 = vmatprep.subr.mxu0 0.0
  %1031 = vmatpush2.msra.mxu0 0.0
  %1032 = vmatprep.subr.mxu0 0.0
  %1033 = vmatpush2.msra.mxu0 0.0
  %1034 = vmatprep.subr.mxu0 0.0
  %1035 = vmatpush2.msra.mxu0 0.0
  %1036 = vmatprep.subr.mxu0 0.0
  %1037 = vmatpush2.msra.mxu0 0.0
  %1038 = vmatprep.subr.mxu0 0.0
  %1039 = vmatpush2.msra.mxu0 0.0
  %1040 = vmatprep.subr.mxu0 0.0
  %1041 = vmatpush2.msra.mxu0 0.0
  %1042 = vmatprep.subr.mxu0 0.0
  %1043 = vmatpush2.msra.mxu0 0.0
  %1044 = vmatprep.subr.mxu0 0.0
  %1045 = vmatpush2.msra.mxu0 0.0
  %1046 = vmatprep.subr.mxu0 0.0
  %1047 = vmatpush2.msra.mxu0 0.0
  %1048 = vmatprep.subr.mxu0 0.0
  %1049 = vmatpush2.msra.mxu0 0.0
  %1050 = vmatprep.subr.mxu0 0.0
  %1051 = vmatpush2.msra.mxu0 0.0
  %1052 = vmatprep.subr.mxu0 0.0
  %1053 = vmatpush2.msra.mxu0 0.0
  %1054 = vmatprep.subr.mxu0 0.0
  %1055 = vmatpush2.msra.mxu0 0.0
  %1056 = vmatprep.subr.mxu0 0.0
  %1057 = vmatpush2.msra.mxu0 0.0
  %1058 = vmatprep.subr.mxu0 0.0
  %1059 = vmatpush2.msra.mxu0 0.0
  %1060 = vmatprep.subr.mxu0 0.0
  %1061 = vmatpush2.msra.mxu0 0.0
  %1062 = vmatprep.mubr.f32.mxu0 0.0
  %1063 = vmatmul.mubr.f32.gmra.mxu0 %v993
  %v1064 = vpop.f32.mrf.mxu0
  %v1065 = vadd.f32 %v989, %v1064
  %v1066 = vpop.f32.mrf.mxu0
  %1067 = vmatprep.mubr.f32.mxu0 0.0
  %1068 = vmatmul.mubr.f32.gmra.mxu0 %v996
  %v1069 = vpop.f32.mrf.mxu0
  %v1070 = vadd.f32 %v989, %v1069
  %v1071 = vpop.f32.mrf.mxu0
  %1072 = vdwg.mxu0
  %1073 = vmatprep.subr.mxu0 0.0
  %1074 = vmatpush1.msra.mxu0 0.0
  %1075 = vmatprep.subr.mxu0 0.0
  %1076 = vmatpush1.msra.mxu0 0.0
  %1077 = vmatprep.subr.mxu0 0.0
  %1078 = vmatpush1.msra.mxu0 0.0
  %1079 = vmatprep.subr.mxu0 0.0
  %1080 = vmatpush1.msra.mxu0 0.0
  %1081 = vmatprep.subr.mxu0 0.0
  %1082 = vmatpush1.msra.mxu0 0.0
  %1083 = vmatprep.subr.mxu0 0.0
  %1084 = vmatpush1.msra.mxu0 0.0
  %1085 = vmatprep.subr.mxu0 0.0
  %1086 = vmatpush1.msra.mxu0 0.0
  %1087 = vmatprep.subr.mxu0 0.0
  %1088 = vmatpush1.msra.mxu0 0.0
  %1089 = vmatprep.subr.mxu0 0.0
  %1090 = vmatpush1.msra.mxu0 %v983
  %1091 = vmatprep.subr.mxu0 0.0
  %1092 = vmatpush1.msra.mxu0 %v982
  %1093 = vmatprep.subr.mxu0 0.0
  %1094 = vmatpush1.msra.mxu0 %v981
  %1095 = vmatprep.subr.mxu0 0.0
  %1096 = vmatpush1.msra.mxu0 %v980
  %1097 = vmatprep.subr.mxu0 0.0
  %1098 = vmatpush1.msra.mxu0 %v979
  %1099 = vmatprep.subr.mxu0 0.0
  %1100 = vmatpush1.msra.mxu0 %v978
  %1101 = vmatprep.subr.mxu0 0.0
  %1102 = vmatpush1.msra.mxu0 %v977
  %1103 = vmatprep.subr.mxu0 0.0
  %1104 = vmatpush1.msra.mxu0 %v976
  %1105 = vmatprep.subr.mxu0 0.0
  %1106 = vmatpush2.msra.mxu0 0.0
  %1107 = vmatprep.subr.mxu0 0.0
  %1108 = vmatpush2.msra.mxu0 0.0
  %1109 = vmatprep.subr.mxu0 0.0
  %1110 = vmatpush2.msra.mxu0 0.0
  %1111 = vmatprep.subr.mxu0 0.0
  %1112 = vmatpush2.msra.mxu0 0.0
  %1113 = vmatprep.subr.mxu0 0.0
  %1114 = vmatpush2.msra.mxu0 0.0
  %1115 = vmatprep.subr.mxu0 0.0
  %1116 = vmatpush2.msra.mxu0 0.0
  %1117 = vmatprep.subr.mxu0 0.0
  %1118 = vmatpush2.msra.mxu0 0.0
  %1119 = vmatprep.subr.mxu0 0.0
  %1120 = vmatpush2.msra.mxu0 0.0
  %1121 = vmatprep.subr.mxu0 0.0
  %1122 = vmatpush2.msra.mxu0 0.0
  %1123 = vmatprep.subr.mxu0 0.0
  %1124 = vmatpush2.msra.mxu0 0.0
  %1125 = vmatprep.subr.mxu0 0.0
  %1126 = vmatpush2.msra.mxu0 0.0
  %1127 = vmatprep.subr.mxu0 0.0
  %1128 = vmatpush2.msra.mxu0 0.0
  %1129 = vmatprep.subr.mxu0 0.0
  %1130 = vmatpush2.msra.mxu0 0.0
  %1131 = vmatprep.subr.mxu0 0.0
  %1132 = vmatpush2.msra.mxu0 0.0
  %1133 = vmatprep.subr.mxu0 0.0
  %1134 = vmatpush2.msra.mxu0 0.0
  %1135 = vmatprep.subr.mxu0 0.0
  %1136 = vmatpush2.msra.mxu0 0.0
  %1137 = vmatprep.mubr.f32.mxu0 0.0
  %1138 = vmatmul.mubr.f32.gmra.mxu0 %v993
  %v1139 = vpop.f32.mrf.mxu0
  %v1140 = vadd.f32 0.0, %v1139
  %v1141 = vpop.f32.mrf.mxu0
  %1142 = vmatprep.mubr.f32.mxu0 0.0
  %1143 = vmatmul.mubr.f32.gmra.mxu0 %v996
  %v1144 = vpop.f32.mrf.mxu0
  %v1145 = vadd.f32 0.0, %v1144
  %v1146 = vpop.f32.mrf.mxu0
  %1147 = vdwg.mxu0
  %v1149 = vcombine.high %v1140, %v1140
  %v1151 = vunpack.c.l.s4 1966171168
  %v1152 = vunpack.c.0.s8 %v1151
  %v1153 = vlaneseq
  %v1154 = vshrl.u32 %v1153, 7
  %v1155 = vsub.s32 %v1152, %v1154
  %v1156 = vrot.slane %v1140, %v1155
  %v1158 = vunpack.c.l.s4 1966171168
  %v1159 = vunpack.c.0.s8 %v1158
  %v1160 = vlaneseq
  %v1161 = vshrl.u32 %v1160, 7
  %v1162 = vsub.s32 %v1159, %v1161
  %v1163 = vrot.slane %v1149, %v1162
  %v1164 = vcombine.high %v1156, %v1156
  %v1165 = vcombine.high %v1163, %v1163
  %v1167 = vunpack.c.l.s4 1966171168
  %v1168 = vunpack.c.0.s8 %v1167
  %v1169 = vlaneseq
  %v1170 = vshrl.u32 %v1169, 7
  %v1171 = vsub.s32 %v1168, %v1170
  %v1172 = vrot.slane %v1156, %v1171
  %v1174 = vunpack.c.l.s4 1966171168
  %v1175 = vunpack.c.0.s8 %v1174
  %v1176 = vlaneseq
  %v1177 = vshrl.u32 %v1176, 7
  %v1178 = vsub.s32 %v1175, %v1177
  %v1179 = vrot.slane %v1163, %v1178
  %v1181 = vunpack.c.l.s4 1966171168
  %v1182 = vunpack.c.0.s8 %v1181
  %v1183 = vlaneseq
  %v1184 = vshrl.u32 %v1183, 7
  %v1185 = vsub.s32 %v1182, %v1184
  %v1186 = vrot.slane %v1164, %v1185
  %v1188 = vunpack.c.l.s4 1966171168
  %v1189 = vunpack.c.0.s8 %v1188
  %v1190 = vlaneseq
  %v1191 = vshrl.u32 %v1190, 7
  %v1192 = vsub.s32 %v1189, %v1191
  %v1193 = vrot.slane %v1165, %v1192
  %v1194 = vcombine.high %v1172, %v1172
  %v1195 = vcombine.high %v1179, %v1179
  %v1196 = vcombine.high %v1186, %v1186
  %v1197 = vcombine.high %v1193, %v1193
  %v1198 = vlaneseq
  %v1199 = vshrl.u32 %v1198, 7
  %v1200 = vsub.s32 0, %v1199
  %v1201 = vrot.slane %v1172, %v1200
  %v1202 = vlaneseq
  %v1203 = vshrl.u32 %v1202, 7
  %v1204 = vsub.s32 0, %v1203
  %v1205 = vrot.slane %v1186, %v1204
  %v1206 = vlaneseq
  %v1207 = vshrl.u32 %v1206, 7
  %v1208 = vsub.s32 0, %v1207
  %v1209 = vrot.slane %v1194, %v1208
  %v1210 = vlaneseq
  %v1211 = vshrl.u32 %v1210, 7
  %v1212 = vsub.s32 0, %v1211
  %v1213 = vrot.slane %v1196, %v1212
  %v1214 = vlaneseq
  %v1215 = vshrl.u32 %v1214, 7
  %v1216 = vsub.s32 0, %v1215
  %v1217 = vrot.slane %v1179, %v1216
  %v1218 = vlaneseq
  %v1219 = vshrl.u32 %v1218, 7
  %v1220 = vsub.s32 0, %v1219
  %v1221 = vrot.slane %v1193, %v1220
  %v1222 = vlaneseq
  %v1223 = vshrl.u32 %v1222, 7
  %v1224 = vsub.s32 0, %v1223
  %v1225 = vrot.slane %v1195, %v1224
  %v1226 = vlaneseq
  %v1227 = vshrl.u32 %v1226, 7
  %v1228 = vsub.s32 0, %v1227
  %v1229 = vrot.slane %v1197, %v1228
  %v1238 = vadd.f32 %v1065, %v1201
  %v1239 = vadd.f32 %v1065, %v1205
  %v1240 = vadd.f32 %v1065, %v1209
  %v1241 = vadd.f32 %v1065, %v1213
  %v1242 = vadd.f32 %v1065, %v1217
  %v1243 = vadd.f32 %v1065, %v1221
  %v1244 = vadd.f32 %v1065, %v1225
  %v1245 = vadd.f32 %v1065, %v1229
  %v1246 = vmax.f32 %v1238, 0.0
  %v1247 = vmax.f32 %v1239, 0.0
  %v1248 = vmax.f32 %v1240, 0.0
  %v1249 = vmax.f32 %v1241, 0.0
  %v1250 = vmax.f32 %v1242, 0.0
  %v1251 = vmax.f32 %v1243, 0.0
  %v1252 = vmax.f32 %v1244, 0.0
  %v1253 = vmax.f32 %v1245, 0.0
  %v1255 = vcombine.high %v1145, %v1145
  %v1257 = vunpack.c.l.s4 1966171168
  %v1258 = vunpack.c.0.s8 %v1257
  %v1259 = vlaneseq
  %v1260 = vshrl.u32 %v1259, 7
  %v1261 = vsub.s32 %v1258, %v1260
  %v1262 = vrot.slane %v1145, %v1261
  %v1264 = vunpack.c.l.s4 1966171168
  %v1265 = vunpack.c.0.s8 %v1264
  %v1266 = vlaneseq
  %v1267 = vshrl.u32 %v1266, 7
  %v1268 = vsub.s32 %v1265, %v1267
  %v1269 = vrot.slane %v1255, %v1268
  %v1270 = vcombine.high %v1262, %v1262
  %v1271 = vcombine.high %v1269, %v1269
  %v1273 = vunpack.c.l.s4 1966171168
  %v1274 = vunpack.c.0.s8 %v1273
  %v1275 = vlaneseq
  %v1276 = vshrl.u32 %v1275, 7
  %v1277 = vsub.s32 %v1274, %v1276
  %v1278 = vrot.slane %v1262, %v1277
  %v1280 = vunpack.c.l.s4 1966171168
  %v1281 = vunpack.c.0.s8 %v1280
  %v1282 = vlaneseq
  %v1283 = vshrl.u32 %v1282, 7
  %v1284 = vsub.s32 %v1281, %v1283
  %v1285 = vrot.slane %v1269, %v1284
  %v1287 = vunpack.c.l.s4 1966171168
  %v1288 = vunpack.c.0.s8 %v1287
  %v1289 = vlaneseq
  %v1290 = vshrl.u32 %v1289, 7
  %v1291 = vsub.s32 %v1288, %v1290
  %v1292 = vrot.slane %v1270, %v1291
  %v1294 = vunpack.c.l.s4 1966171168
  %v1295 = vunpack.c.0.s8 %v1294
  %v1296 = vlaneseq
  %v1297 = vshrl.u32 %v1296, 7
  %v1298 = vsub.s32 %v1295, %v1297
  %v1299 = vrot.slane %v1271, %v1298
  %v1300 = vcombine.high %v1278, %v1278
  %v1301 = vcombine.high %v1285, %v1285
  %v1302 = vcombine.high %v1292, %v1292
  %v1303 = vcombine.high %v1299, %v1299
  %v1304 = vlaneseq
  %v1305 = vshrl.u32 %v1304, 7
  %v1306 = vsub.s32 0, %v1305
  %v1307 = vrot.slane %v1278, %v1306
  %v1308 = vlaneseq
  %v1309 = vshrl.u32 %v1308, 7
  %v1310 = vsub.s32 0, %v1309
  %v1311 = vrot.slane %v1292, %v1310
  %v1312 = vlaneseq
  %v1313 = vshrl.u32 %v1312, 7
  %v1314 = vsub.s32 0, %v1313
  %v1315 = vrot.slane %v1300, %v1314
  %v1316 = vlaneseq
  %v1317 = vshrl.u32 %v1316, 7
  %v1318 = vsub.s32 0, %v1317
  %v1319 = vrot.slane %v1302, %v1318
  %v1320 = vlaneseq
  %v1321 = vshrl.u32 %v1320, 7
  %v1322 = vsub.s32 0, %v1321
  %v1323 = vrot.slane %v1285, %v1322
  %v1324 = vlaneseq
  %v1325 = vshrl.u32 %v1324, 7
  %v1326 = vsub.s32 0, %v1325
  %v1327 = vrot.slane %v1299, %v1326
  %v1328 = vlaneseq
  %v1329 = vshrl.u32 %v1328, 7
  %v1330 = vsub.s32 0, %v1329
  %v1331 = vrot.slane %v1301, %v1330
  %v1332 = vlaneseq
  %v1333 = vshrl.u32 %v1332, 7
  %v1334 = vsub.s32 0, %v1333
  %v1335 = vrot.slane %v1303, %v1334
  %v1344 = vadd.f32 %v1070, %v1307
  %v1345 = vadd.f32 %v1070, %v1311
  %v1346 = vadd.f32 %v1070, %v1315
  %v1347 = vadd.f32 %v1070, %v1319
  %v1348 = vadd.f32 %v1070, %v1323
  %v1349 = vadd.f32 %v1070, %v1327
  %v1350 = vadd.f32 %v1070, %v1331
  %v1351 = vadd.f32 %v1070, %v1335
  %v1352 = vmax.f32 %v1344, 0.0
  %v1353 = vmax.f32 %v1345, 0.0
  %v1354 = vmax.f32 %v1346, 0.0
  %v1355 = vmax.f32 %v1347, 0.0
  %v1356 = vmax.f32 %v1348, 0.0
  %v1357 = vmax.f32 %v1349, 0.0
  %v1358 = vmax.f32 %v1350, 0.0
  %v1359 = vmax.f32 %v1351, 0.0
  %v1360 = vld [vmem:[%s8] sm:$0xff]
  %v1361 = vld [vmem:[%s8 + $0x8] sm:$0xff]
  %v1362 = vld [vmem:[%s8 + $0x10] sm:$0xff]
  %v1363 = vld [vmem:[%s8 + $0x18] sm:$0xff]
  %v1364 = vld [vmem:[%s8 + $0x20] sm:$0xff]
  %v1365 = vld [vmem:[%s8 + $0x28] sm:$0xff]
  %v1366 = vld [vmem:[%s8 + $0x30] sm:$0xff]
  %v1367 = vld [vmem:[%s8 + $0x38] sm:$0xff]
  %v1368 = vld [vmem:[%s8 + $0x40] sm:$0xff]
  %v1369 = vld [vmem:[%s8 + $0x48] sm:$0xff]
  %v1370 = vld [vmem:[%s8 + $0x50] sm:$0xff]
  %v1371 = vld [vmem:[%s8 + $0x58] sm:$0xff]
  %v1372 = vld [vmem:[%s8 + $0x60] sm:$0xff]
  %v1373 = vld [vmem:[%s8 + $0x68] sm:$0xff]
  %v1374 = vld [vmem:[%s8 + $0x70] sm:$0xff]
  %v1375 = vld [vmem:[%s8 + $0x78] sm:$0xff]
  %v1376 = vld [vmem:[%s9] sm:$0x1]
  %v1378 = vlaneseq
  %v1379 = vshrl.u32 %v1378, 7
  %v1380 = vsub.s32 0, %v1379
  %v1381 = vrot.slane %v1376, %v1380
  %1383 = vmatprep.subr.mxu0 0.0
  %1384 = vmatpush1.msra.mxu0 %v1375
  %1385 = vmatprep.subr.mxu0 0.0
  %1386 = vmatpush1.msra.mxu0 %v1374
  %1387 = vmatprep.subr.mxu0 0.0
  %1388 = vmatpush1.msra.mxu0 %v1373
  %1389 = vmatprep.subr.mxu0 0.0
  %1390 = vmatpush1.msra.mxu0 %v1372
  %1391 = vmatprep.subr.mxu0 0.0
  %1392 = vmatpush1.msra.mxu0 %v1371
  %1393 = vmatprep.subr.mxu0 0.0
  %1394 = vmatpush1.msra.mxu0 %v1370
  %1395 = vmatprep.subr.mxu0 0.0
  %1396 = vmatpush1.msra.mxu0 %v1369
  %1397 = vmatprep.subr.mxu0 0.0
  %1398 = vmatpush1.msra.mxu0 %v1368
  %1399 = vmatprep.subr.mxu0 0.0
  %1400 = vmatpush1.msra.mxu0 %v1367
  %1401 = vmatprep.subr.mxu0 0.0
  %1402 = vmatpush1.msra.mxu0 %v1366
  %1403 = vmatprep.subr.mxu0 0.0
  %1404 = vmatpush1.msra.mxu0 %v1365
  %1405 = vmatprep.subr.mxu0 0.0
  %1406 = vmatpush1.msra.mxu0 %v1364
  %1407 = vmatprep.subr.mxu0 0.0
  %1408 = vmatpush1.msra.mxu0 %v1363
  %1409 = vmatprep.subr.mxu0 0.0
  %1410 = vmatpush1.msra.mxu0 %v1362
  %1411 = vmatprep.subr.mxu0 0.0
  %1412 = vmatpush1.msra.mxu0 %v1361
  %1413 = vmatprep.subr.mxu0 0.0
  %1414 = vmatpush1.msra.mxu0 %v1360
  %1415 = vmatprep.subr.mxu0 0.0
  %1416 = vmatpush2.msra.mxu0 0.0
  %1417 = vmatprep.subr.mxu0 0.0
  %1418 = vmatpush2.msra.mxu0 0.0
  %1419 = vmatprep.subr.mxu0 0.0
  %1420 = vmatpush2.msra.mxu0 0.0
  %1421 = vmatprep.subr.mxu0 0.0
  %1422 = vmatpush2.msra.mxu0 0.0
  %1423 = vmatprep.subr.mxu0 0.0
  %1424 = vmatpush2.msra.mxu0 0.0
  %1425 = vmatprep.subr.mxu0 0.0
  %1426 = vmatpush2.msra.mxu0 0.0
  %1427 = vmatprep.subr.mxu0 0.0
  %1428 = vmatpush2.msra.mxu0 0.0
  %1429 = vmatprep.subr.mxu0 0.0
  %1430 = vmatpush2.msra.mxu0 0.0
  %1431 = vmatprep.subr.mxu0 0.0
  %1432 = vmatpush2.msra.mxu0 0.0
  %1433 = vmatprep.subr.mxu0 0.0
  %1434 = vmatpush2.msra.mxu0 0.0
  %1435 = vmatprep.subr.mxu0 0.0
  %1436 = vmatpush2.msra.mxu0 0.0
  %1437 = vmatprep.subr.mxu0 0.0
  %1438 = vmatpush2.msra.mxu0 0.0
  %1439 = vmatprep.subr.mxu0 0.0
  %1440 = vmatpush2.msra.mxu0 0.0
  %1441 = vmatprep.subr.mxu0 0.0
  %1442 = vmatpush2.msra.mxu0 0.0
  %1443 = vmatprep.subr.mxu0 0.0
  %1444 = vmatpush2.msra.mxu0 0.0
  %1445 = vmatprep.subr.mxu0 0.0
  %1446 = vmatpush2.msra.mxu0 0.0
  %1447 = vmatprep.mubr.f32.mxu0 0.0
  %1448 = vmatmul.mubr.f32.gmra.mxu0 %v1246
  %v1449 = vpop.f32.mrf.mxu0
  %v1450 = vadd.f32 %v1381, %v1449
  %v1451 = vpop.f32.mrf.mxu0
  %1452 = vmatprep.mubr.f32.mxu0 0.0
  %1453 = vmatmul.mubr.f32.gmra.mxu0 %v1247
  %v1454 = vpop.f32.mrf.mxu0
  %v1455 = vadd.f32 %v1381, %v1454
  %v1456 = vpop.f32.mrf.mxu0
  %1457 = vmatprep.mubr.f32.mxu0 0.0
  %1458 = vmatmul.mubr.f32.gmra.mxu0 %v1248
  %v1459 = vpop.f32.mrf.mxu0
  %v1460 = vadd.f32 %v1381, %v1459
  %v1461 = vpop.f32.mrf.mxu0
  %1462 = vmatprep.mubr.f32.mxu0 0.0
  %1463 = vmatmul.mubr.f32.gmra.mxu0 %v1249
  %v1464 = vpop.f32.mrf.mxu0
  %v1465 = vadd.f32 %v1381, %v1464
  %v1466 = vpop.f32.mrf.mxu0
  %1467 = vmatprep.mubr.f32.mxu0 0.0
  %1468 = vmatmul.mubr.f32.gmra.mxu0 %v1250
  %v1469 = vpop.f32.mrf.mxu0
  %v1470 = vadd.f32 %v1381, %v1469
  %v1471 = vpop.f32.mrf.mxu0
  %1472 = vmatprep.mubr.f32.mxu0 0.0
  %1473 = vmatmul.mubr.f32.gmra.mxu0 %v1251
  %v1474 = vpop.f32.mrf.mxu0
  %v1475 = vadd.f32 %v1381, %v1474
  %v1476 = vpop.f32.mrf.mxu0
  %1477 = vmatprep.mubr.f32.mxu0 0.0
  %1478 = vmatmul.mubr.f32.gmra.mxu0 %v1252
  %v1479 = vpop.f32.mrf.mxu0
  %v1480 = vadd.f32 %v1381, %v1479
  %v1481 = vpop.f32.mrf.mxu0
  %1482 = vmatprep.mubr.f32.mxu0 0.0
  %1483 = vmatmul.mubr.f32.gmra.mxu0 %v1253
  %v1484 = vpop.f32.mrf.mxu0
  %v1485 = vadd.f32 %v1381, %v1484
  %v1486 = vpop.f32.mrf.mxu0
  %1487 = vmatprep.mubr.f32.mxu0 0.0
  %1488 = vmatmul.mubr.f32.gmra.mxu0 %v1352
  %v1489 = vpop.f32.mrf.mxu0
  %v1490 = vadd.f32 %v1381, %v1489
  %v1491 = vpop.f32.mrf.mxu0
  %1492 = vmatprep.mubr.f32.mxu0 0.0
  %1493 = vmatmul.mubr.f32.gmra.mxu0 %v1353
  %v1494 = vpop.f32.mrf.mxu0
  %v1495 = vadd.f32 %v1381, %v1494
  %v1496 = vpop.f32.mrf.mxu0
  %1497 = vmatprep.mubr.f32.mxu0 0.0
  %1498 = vmatmul.mubr.f32.gmra.mxu0 %v1354
  %v1499 = vpop.f32.mrf.mxu0
  %v1500 = vadd.f32 %v1381, %v1499
  %v1501 = vpop.f32.mrf.mxu0
  %1502 = vmatprep.mubr.f32.mxu0 0.0
  %1503 = vmatmul.mubr.f32.gmra.mxu0 %v1355
  %v1504 = vpop.f32.mrf.mxu0
  %v1505 = vadd.f32 %v1381, %v1504
  %v1506 = vpop.f32.mrf.mxu0
  %1507 = vmatprep.mubr.f32.mxu0 0.0
  %1508 = vmatmul.mubr.f32.gmra.mxu0 %v1356
  %v1509 = vpop.f32.mrf.mxu0
  %v1510 = vadd.f32 %v1381, %v1509
  %v1511 = vpop.f32.mrf.mxu0
  %1512 = vmatprep.mubr.f32.mxu0 0.0
  %1513 = vmatmul.mubr.f32.gmra.mxu0 %v1357
  %v1514 = vpop.f32.mrf.mxu0
  %v1515 = vadd.f32 %v1381, %v1514
  %v1516 = vpop.f32.mrf.mxu0
  %1517 = vmatprep.mubr.f32.mxu0 0.0
  %1518 = vmatmul.mubr.f32.gmra.mxu0 %v1358
  %v1519 = vpop.f32.mrf.mxu0
  %v1520 = vadd.f32 %v1381, %v1519
  %v1521 = vpop.f32.mrf.mxu0
  %1522 = vmatprep.mubr.f32.mxu0 0.0
  %1523 = vmatmul.mubr.f32.gmra.mxu0 %v1359
  %v1524 = vpop.f32.mrf.mxu0
  %v1525 = vadd.f32 %v1381, %v1524
  %v1526 = vpop.f32.mrf.mxu0
  %1527 = vdwg.mxu0
  %1528 = vst [vmem:[%s10] sm:$0xff] %v1450
  %1529 = vst [vmem:[%s10 + $0x8] sm:$0xff] %v1455
  %1530 = vst [vmem:[%s10 + $0x10] sm:$0xff] %v1460
  %1531 = vst [vmem:[%s10 + $0x18] sm:$0xff] %v1465
  %1532 = vst [vmem:[%s10 + $0x20] sm:$0xff] %v1470
  %1533 = vst [vmem:[%s10 + $0x28] sm:$0xff] %v1475
  %1534 = vst [vmem:[%s10 + $0x30] sm:$0xff] %v1480
  %1535 = vst [vmem:[%s10 + $0x38] sm:$0xff] %v1485
  %1536 = vst [vmem:[%s10 + $0x40] sm:$0xff] %v1490
  %1537 = vst [vmem:[%s10 + $0x48] sm:$0xff] %v1495
  %1538 = vst [vmem:[%s10 + $0x50] sm:$0xff] %v1500
  %1539 = vst [vmem:[%s10 + $0x58] sm:$0xff] %v1505
  %1540 = vst [vmem:[%s10 + $0x60] sm:$0xff] %v1510
  %1541 = vst [vmem:[%s10 + $0x68] sm:$0xff] %v1515
  %1542 = vst [vmem:[%s10 + $0x70] sm:$0xff] %v1520
  %1543 = vst [vmem:[%s10 + $0x78] sm:$0xff] %v1525
  // Predicated region
  $region42: #{bert_gcn0_forward.1} parent=0 // pred_check
    _
  $region43: #{bert_gcn0_forward.1} parent=0 // pred_check_branch
    %1545 = sbr.rel (0) target = $region45
  $region44: #{bert_gcn0_forward.1} parent=0 // pred_region
    _
  $region45: #{bert_gcn0_forward.1} parent=0 // pred_fallthru
    _
  // Predicated region
  $region46: #{bert_gcn0_forward.1} parent=0 // pred_check
    _
  $region47: #{bert_gcn0_forward.1} parent=0 // pred_check_branch
    %1547 = sbr.rel (0) target = $region49
  $region48: #{bert_gcn0_forward.1} parent=0 // pred_region
    _
  $region49: #{bert_gcn0_forward.1} parent=0 // pred_fallthru
    _

</llo_original>
